<compile_context>
chip_gen: v7x
topology: tpu7x:2x2x1
jax: 0.10.0
libtpu: 0.0.40
codegen_flags: <defaults>
</compile_context>

<pallas_src>
import functools
import math

import jax
import jax.numpy as jnp
from jax.experimental import pallas as pl
from jax.experimental.pallas import tpu as pltpu

_GELU_C = math.sqrt(2.0 / math.pi)


def _gelu_tanh(x):
    # GELU (tanh approximation), matching the book's GELU module.
    return 0.5 * x * (1.0 + jnp.tanh(_GELU_C * (x + 0.044715 * x * x * x)))


def _mlp_kernel(use_shortcut, x_ref,
                w1, b1, w2, b2, w3, b3, w4, b4, w5, b5,
                out_ref):
    """Full 5-layer forward for one batch tile; activations stay in VMEM/vregs."""
    h = x_ref[...].astype(jnp.float32)

    def layer(h, w_ref, b_ref):
        # bf16 MXU inputs, f32 accumulation (preferred_element_type).
        acc = jnp.dot(h.astype(jnp.bfloat16), w_ref[...],
                      preferred_element_type=jnp.float32)
        acc = acc + b_ref[...]                      # (1, N) bias broadcast, once per tile
        y = _gelu_tanh(acc)                         # VPU/EUP epilogue in f32
        if use_shortcut and h.shape == y.shape:     # static (trace-time) decision
            y = h + y
        return y

    for w_ref, b_ref in ((w1, b1), (w2, b2), (w3, b3), (w4, b4), (w5, b5)):
        h = layer(h, w_ref, b_ref)

    out_ref[...] = h.astype(out_ref.dtype)


def example_deep_nn_forward(x, weights_pt, biases, use_shortcut, *, batch_tile=128):
    """x: [batch, d_in] f32. weights_pt: PyTorch-layout [out, in]. biases: [out]."""
    batch, d_in = x.shape

    # One-time host-side transpose to [in, out] + bf16 cast (MXU input dtype).
    ws = [jnp.asarray(w).T.astype(jnp.bfloat16) for w in weights_pt]
    bs = [jnp.asarray(b, jnp.float32).reshape(1, -1) for b in biases]
    d_out = ws[-1].shape[1]

    tb = min(batch_tile, batch)
    assert batch % tb == 0, "batch must be divisible by the batch tile"

    const_map = lambda i: (0, 0)      # weights/biases: same block for every batch tile
    in_specs = [pl.BlockSpec((tb, d_in), lambda i: (i, 0))]
    flat_inputs = [x]
    for w, b in zip(ws, bs):
        in_specs.append(pl.BlockSpec(w.shape, const_map))   # full array, VMEM-resident
        in_specs.append(pl.BlockSpec(b.shape, const_map))
        flat_inputs += [w, b]

    kernel = functools.partial(_mlp_kernel, bool(use_shortcut))

    return pl.pallas_call(
        kernel,
        out_shape=jax.ShapeDtypeStruct((batch, d_out), jnp.float32),
        grid_spec=pltpu.PrefetchScalarGridSpec(
            num_scalar_prefetch=0,
            grid=(batch // tb,),
            in_specs=in_specs,
            out_specs=pl.BlockSpec((tb, d_out), lambda i: (i, 0)),
        ),
        compiler_params=pltpu.CompilerParams(
            dimension_semantics=("parallel",),     # megacore-split batch tiles
            vmem_limit_bytes=32 * 1024 * 1024,     # safe on v5e/v6e (128 MiB) and v7x (64 MiB)
        ),
    )(*flat_inputs)


def reference_forward(x, weights_pt, biases, use_shortcut):
    """Pure-JAX reference with the same precision recipe (bf16 matmul, f32 accum)."""
    h = jnp.asarray(x, jnp.float32)
    for w, b in zip(weights_pt, biases):
        acc = jnp.dot(h.astype(jnp.bfloat16),
                      jnp.asarray(w).T.astype(jnp.bfloat16),
                      preferred_element_type=jnp.float32)
        acc = acc + jnp.asarray(b, jnp.float32).reshape(1, -1)
        y = _gelu_tanh(acc)
        h = h + y if (use_shortcut and h.shape == y.shape) else y
    return h


if __name__ == "__main__":
    # Small, lane-dense shapes consistent with the module:
    # 5 Linear+GELU layers; the last layer changes width so the shortcut is
    # skipped there (shape mismatch), exercising both branches.
    layer_sizes = [128, 128, 128, 128, 128, 256]
    use_shortcut = True
    batch = 256  # 2 batch tiles of 128

    keys = jax.random.split(jax.random.PRNGKey(0), 11)
    x = jax.random.normal(keys[0], (batch, layer_sizes[0]), jnp.float32)

    weights, biases = [], []
    for li in range(5):
        fan_in, fan_out = layer_sizes[li], layer_sizes[li + 1]
        scale = 1.0 / math.sqrt(fan_in)
        weights.append(jax.random.uniform(
            keys[2 * li + 1], (fan_out, fan_in), jnp.float32, -scale, scale))
        biases.append(jax.random.uniform(
            keys[2 * li + 2], (fan_out,), jnp.float32, -scale, scale))

    out = jax.block_until_ready(
        example_deep_nn_forward(x, weights, biases, use_shortcut))

    ref = reference_forward(x, weights, biases, use_shortcut)
    assert out.shape == (batch, layer_sizes[-1])
    max_err = float(jnp.max(jnp.abs(out - ref)))
    assert jnp.allclose(out, ref, atol=2e-2, rtol=2e-2), f"max_err={max_err}"

    print("KERNEL_OK")
</pallas_src>

<mosaic_0001>
module attributes {stable_mosaic.version = 11 : i64} {
  func.func @_mlp_kernel(%arg0: i32, %arg1: memref<128x128xf32, #tpu.memory_space<vmem>>, %arg2: memref<128x128xbf16, #tpu.memory_space<vmem>>, %arg3: memref<1x128xf32, #tpu.memory_space<vmem>>, %arg4: memref<128x128xbf16, #tpu.memory_space<vmem>>, %arg5: memref<1x128xf32, #tpu.memory_space<vmem>>, %arg6: memref<128x128xbf16, #tpu.memory_space<vmem>>, %arg7: memref<1x128xf32, #tpu.memory_space<vmem>>, %arg8: memref<128x128xbf16, #tpu.memory_space<vmem>>, %arg9: memref<1x128xf32, #tpu.memory_space<vmem>>, %arg10: memref<128x256xbf16, #tpu.memory_space<vmem>>, %arg11: memref<1x256xf32, #tpu.memory_space<vmem>>, %arg12: memref<128x256xf32, #tpu.memory_space<vmem>>) attributes {dimension_semantics = [#tpu.dimension_semantics<parallel>], iteration_bounds = array<i64: 2>, scalar_prefetch = 0 : i64, scratch_operands = 0 : i64, tpu.core_type = #tpu.core_type<tc>, window_params = [{transform_indices = @transform_0, window_bounds = array<i64: 128, 128>}, {pipeline_mode = #tpu.pipeline_mode<synchronous>, transform_indices = @transform_1, window_bounds = array<i64: 128, 128>}, {pipeline_mode = #tpu.pipeline_mode<synchronous>, transform_indices = @transform_2, window_bounds = array<i64: 1, 128>}, {pipeline_mode = #tpu.pipeline_mode<synchronous>, transform_indices = @transform_3, window_bounds = array<i64: 128, 128>}, {pipeline_mode = #tpu.pipeline_mode<synchronous>, transform_indices = @transform_4, window_bounds = array<i64: 1, 128>}, {pipeline_mode = #tpu.pipeline_mode<synchronous>, transform_indices = @transform_5, window_bounds = array<i64: 128, 128>}, {pipeline_mode = #tpu.pipeline_mode<synchronous>, transform_indices = @transform_6, window_bounds = array<i64: 1, 128>}, {pipeline_mode = #tpu.pipeline_mode<synchronous>, transform_indices = @transform_7, window_bounds = array<i64: 128, 128>}, {pipeline_mode = #tpu.pipeline_mode<synchronous>, transform_indices = @transform_8, window_bounds = array<i64: 1, 128>}, {pipeline_mode = #tpu.pipeline_mode<synchronous>, transform_indices = @transform_9, window_bounds = array<i64: 128, 256>}, {pipeline_mode = #tpu.pipeline_mode<synchronous>, transform_indices = @transform_10, window_bounds = array<i64: 1, 256>}, {transform_indices = @transform_11, window_bounds = array<i64: 128, 256>}]} {
    %c0 = arith.constant 0 : index
    %c0_0 = arith.constant 0 : index
    %0 = vector.load %arg1[%c0, %c0_0] : memref<128x128xf32, #tpu.memory_space<vmem>>, vector<128x128xf32>
    %1 = arith.truncf %0 : vector<128x128xf32> to vector<128x128xbf16>
    %c0_1 = arith.constant 0 : index
    %c0_2 = arith.constant 0 : index
    %2 = vector.load %arg2[%c0_1, %c0_2] : memref<128x128xbf16, #tpu.memory_space<vmem>>, vector<128x128xbf16>
    %cst = arith.constant dense<0.000000e+00> : vector<128x128xf32>
    %3 = tpu.matmul %1, %2, %cst {dimension_numbers = #tpu.dot_dimension_numbers<[1], [0], [0], [1], [0, 0, 1, 1], [], []>} : vector<128x128xbf16>, vector<128x128xbf16>, vector<128x128xf32> -> vector<128x128xf32>
    %c0_3 = arith.constant 0 : index
    %c0_4 = arith.constant 0 : index
    %4 = vector.load %arg3[%c0_3, %c0_4] : memref<1x128xf32, #tpu.memory_space<vmem>>, vector<1x128xf32>
    %5 = vector.broadcast %4 : vector<1x128xf32> to vector<128x128xf32>
    %6 = arith.addf %3, %5 : vector<128x128xf32>
    %cst_5 = arith.constant 5.000000e-01 : f32
    %7 = vector.broadcast %cst_5 : f32 to vector<128x128xf32>
    %8 = arith.mulf %7, %6 : vector<128x128xf32>
    %cst_6 = arith.constant 4.471500e-02 : f32
    %9 = vector.broadcast %cst_6 : f32 to vector<128x128xf32>
    %10 = arith.mulf %9, %6 : vector<128x128xf32>
    %11 = arith.mulf %10, %6 : vector<128x128xf32>
    %12 = arith.mulf %11, %6 : vector<128x128xf32>
    %13 = arith.addf %6, %12 : vector<128x128xf32>
    %cst_7 = arith.constant 0.797884583 : f32
    %14 = vector.broadcast %cst_7 : f32 to vector<128x128xf32>
    %15 = arith.mulf %14, %13 : vector<128x128xf32>
    %16 = math.tanh %15 : vector<128x128xf32>
    %cst_8 = arith.constant 1.000000e+00 : f32
    %17 = vector.broadcast %cst_8 : f32 to vector<128x128xf32>
    %18 = arith.addf %17, %16 : vector<128x128xf32>
    %19 = arith.mulf %8, %18 : vector<128x128xf32>
    %20 = arith.addf %0, %19 : vector<128x128xf32>
    %21 = arith.truncf %20 : vector<128x128xf32> to vector<128x128xbf16>
    %c0_9 = arith.constant 0 : index
    %c0_10 = arith.constant 0 : index
    %22 = vector.load %arg4[%c0_9, %c0_10] : memref<128x128xbf16, #tpu.memory_space<vmem>>, vector<128x128xbf16>
    %cst_11 = arith.constant dense<0.000000e+00> : vector<128x128xf32>
    %23 = tpu.matmul %21, %22, %cst_11 {dimension_numbers = #tpu.dot_dimension_numbers<[1], [0], [0], [1], [0, 0, 1, 1], [], []>} : vector<128x128xbf16>, vector<128x128xbf16>, vector<128x128xf32> -> vector<128x128xf32>
    %c0_12 = arith.constant 0 : index
    %c0_13 = arith.constant 0 : index
    %24 = vector.load %arg5[%c0_12, %c0_13] : memref<1x128xf32, #tpu.memory_space<vmem>>, vector<1x128xf32>
    %25 = vector.broadcast %24 : vector<1x128xf32> to vector<128x128xf32>
    %26 = arith.addf %23, %25 : vector<128x128xf32>
    %cst_14 = arith.constant 5.000000e-01 : f32
    %27 = vector.broadcast %cst_14 : f32 to vector<128x128xf32>
    %28 = arith.mulf %27, %26 : vector<128x128xf32>
    %cst_15 = arith.constant 4.471500e-02 : f32
    %29 = vector.broadcast %cst_15 : f32 to vector<128x128xf32>
    %30 = arith.mulf %29, %26 : vector<128x128xf32>
    %31 = arith.mulf %30, %26 : vector<128x128xf32>
    %32 = arith.mulf %31, %26 : vector<128x128xf32>
    %33 = arith.addf %26, %32 : vector<128x128xf32>
    %cst_16 = arith.constant 0.797884583 : f32
    %34 = vector.broadcast %cst_16 : f32 to vector<128x128xf32>
    %35 = arith.mulf %34, %33 : vector<128x128xf32>
    %36 = math.tanh %35 : vector<128x128xf32>
    %cst_17 = arith.constant 1.000000e+00 : f32
    %37 = vector.broadcast %cst_17 : f32 to vector<128x128xf32>
    %38 = arith.addf %37, %36 : vector<128x128xf32>
    %39 = arith.mulf %28, %38 : vector<128x128xf32>
    %40 = arith.addf %20, %39 : vector<128x128xf32>
    %41 = arith.truncf %40 : vector<128x128xf32> to vector<128x128xbf16>
    %c0_18 = arith.constant 0 : index
    %c0_19 = arith.constant 0 : index
    %42 = vector.load %arg6[%c0_18, %c0_19] : memref<128x128xbf16, #tpu.memory_space<vmem>>, vector<128x128xbf16>
    %cst_20 = arith.constant dense<0.000000e+00> : vector<128x128xf32>
    %43 = tpu.matmul %41, %42, %cst_20 {dimension_numbers = #tpu.dot_dimension_numbers<[1], [0], [0], [1], [0, 0, 1, 1], [], []>} : vector<128x128xbf16>, vector<128x128xbf16>, vector<128x128xf32> -> vector<128x128xf32>
    %c0_21 = arith.constant 0 : index
    %c0_22 = arith.constant 0 : index
    %44 = vector.load %arg7[%c0_21, %c0_22] : memref<1x128xf32, #tpu.memory_space<vmem>>, vector<1x128xf32>
    %45 = vector.broadcast %44 : vector<1x128xf32> to vector<128x128xf32>
    %46 = arith.addf %43, %45 : vector<128x128xf32>
    %cst_23 = arith.constant 5.000000e-01 : f32
    %47 = vector.broadcast %cst_23 : f32 to vector<128x128xf32>
    %48 = arith.mulf %47, %46 : vector<128x128xf32>
    %cst_24 = arith.constant 4.471500e-02 : f32
    %49 = vector.broadcast %cst_24 : f32 to vector<128x128xf32>
    %50 = arith.mulf %49, %46 : vector<128x128xf32>
    %51 = arith.mulf %50, %46 : vector<128x128xf32>
    %52 = arith.mulf %51, %46 : vector<128x128xf32>
    %53 = arith.addf %46, %52 : vector<128x128xf32>
    %cst_25 = arith.constant 0.797884583 : f32
    %54 = vector.broadcast %cst_25 : f32 to vector<128x128xf32>
    %55 = arith.mulf %54, %53 : vector<128x128xf32>
    %56 = math.tanh %55 : vector<128x128xf32>
    %cst_26 = arith.constant 1.000000e+00 : f32
    %57 = vector.broadcast %cst_26 : f32 to vector<128x128xf32>
    %58 = arith.addf %57, %56 : vector<128x128xf32>
    %59 = arith.mulf %48, %58 : vector<128x128xf32>
    %60 = arith.addf %40, %59 : vector<128x128xf32>
    %61 = arith.truncf %60 : vector<128x128xf32> to vector<128x128xbf16>
    %c0_27 = arith.constant 0 : index
    %c0_28 = arith.constant 0 : index
    %62 = vector.load %arg8[%c0_27, %c0_28] : memref<128x128xbf16, #tpu.memory_space<vmem>>, vector<128x128xbf16>
    %cst_29 = arith.constant dense<0.000000e+00> : vector<128x128xf32>
    %63 = tpu.matmul %61, %62, %cst_29 {dimension_numbers = #tpu.dot_dimension_numbers<[1], [0], [0], [1], [0, 0, 1, 1], [], []>} : vector<128x128xbf16>, vector<128x128xbf16>, vector<128x128xf32> -> vector<128x128xf32>
    %c0_30 = arith.constant 0 : index
    %c0_31 = arith.constant 0 : index
    %64 = vector.load %arg9[%c0_30, %c0_31] : memref<1x128xf32, #tpu.memory_space<vmem>>, vector<1x128xf32>
    %65 = vector.broadcast %64 : vector<1x128xf32> to vector<128x128xf32>
    %66 = arith.addf %63, %65 : vector<128x128xf32>
    %cst_32 = arith.constant 5.000000e-01 : f32
    %67 = vector.broadcast %cst_32 : f32 to vector<128x128xf32>
    %68 = arith.mulf %67, %66 : vector<128x128xf32>
    %cst_33 = arith.constant 4.471500e-02 : f32
    %69 = vector.broadcast %cst_33 : f32 to vector<128x128xf32>
    %70 = arith.mulf %69, %66 : vector<128x128xf32>
    %71 = arith.mulf %70, %66 : vector<128x128xf32>
    %72 = arith.mulf %71, %66 : vector<128x128xf32>
    %73 = arith.addf %66, %72 : vector<128x128xf32>
    %cst_34 = arith.constant 0.797884583 : f32
    %74 = vector.broadcast %cst_34 : f32 to vector<128x128xf32>
    %75 = arith.mulf %74, %73 : vector<128x128xf32>
    %76 = math.tanh %75 : vector<128x128xf32>
    %cst_35 = arith.constant 1.000000e+00 : f32
    %77 = vector.broadcast %cst_35 : f32 to vector<128x128xf32>
    %78 = arith.addf %77, %76 : vector<128x128xf32>
    %79 = arith.mulf %68, %78 : vector<128x128xf32>
    %80 = arith.addf %60, %79 : vector<128x128xf32>
    %81 = arith.truncf %80 : vector<128x128xf32> to vector<128x128xbf16>
    %c0_36 = arith.constant 0 : index
    %c0_37 = arith.constant 0 : index
    %82 = vector.load %arg10[%c0_36, %c0_37] : memref<128x256xbf16, #tpu.memory_space<vmem>>, vector<128x256xbf16>
    %cst_38 = arith.constant dense<0.000000e+00> : vector<128x256xf32>
    %83 = tpu.matmul %81, %82, %cst_38 {dimension_numbers = #tpu.dot_dimension_numbers<[1], [0], [0], [1], [0, 0, 1, 1], [], []>} : vector<128x128xbf16>, vector<128x256xbf16>, vector<128x256xf32> -> vector<128x256xf32>
    %c0_39 = arith.constant 0 : index
    %c0_40 = arith.constant 0 : index
    %84 = vector.load %arg11[%c0_39, %c0_40] : memref<1x256xf32, #tpu.memory_space<vmem>>, vector<1x256xf32>
    %85 = vector.broadcast %84 : vector<1x256xf32> to vector<128x256xf32>
    %86 = arith.addf %83, %85 : vector<128x256xf32>
    %cst_41 = arith.constant 5.000000e-01 : f32
    %87 = vector.broadcast %cst_41 : f32 to vector<128x256xf32>
    %88 = arith.mulf %87, %86 : vector<128x256xf32>
    %cst_42 = arith.constant 4.471500e-02 : f32
    %89 = vector.broadcast %cst_42 : f32 to vector<128x256xf32>
    %90 = arith.mulf %89, %86 : vector<128x256xf32>
    %91 = arith.mulf %90, %86 : vector<128x256xf32>
    %92 = arith.mulf %91, %86 : vector<128x256xf32>
    %93 = arith.addf %86, %92 : vector<128x256xf32>
    %cst_43 = arith.constant 0.797884583 : f32
    %94 = vector.broadcast %cst_43 : f32 to vector<128x256xf32>
    %95 = arith.mulf %94, %93 : vector<128x256xf32>
    %96 = math.tanh %95 : vector<128x256xf32>
    %cst_44 = arith.constant 1.000000e+00 : f32
    %97 = vector.broadcast %cst_44 : f32 to vector<128x256xf32>
    %98 = arith.addf %97, %96 : vector<128x256xf32>
    %99 = arith.mulf %88, %98 : vector<128x256xf32>
    %c0_45 = arith.constant 0 : index
    %c0_46 = arith.constant 0 : index
    %100 = vector.load %arg12[%c0_45, %c0_46] : memref<128x256xf32, #tpu.memory_space<vmem>>, vector<128x256xf32>
    tpu.vector_store %arg12[%c0_45, %c0_46], %99 {strides = array<i32>} : memref<128x256xf32, #tpu.memory_space<vmem>>, vector<128x256xf32>,
    return
  }
  func.func @transform_0(%arg0: i32) -> (i32, i32) {
    %c0_i32 = arith.constant 0 : i32
    %c0_i32_0 = arith.constant 0 : i32
    return %arg0, %c0_i32 : i32, i32
  }
  func.func @transform_1(%arg0: i32) -> (i32, i32) {
    %c0_i32 = arith.constant 0 : i32
    %c0_i32_0 = arith.constant 0 : i32
    %c0_i32_1 = arith.constant 0 : i32
    return %c0_i32, %c0_i32_0 : i32, i32
  }
  func.func @transform_2(%arg0: i32) -> (i32, i32) {
    %c0_i32 = arith.constant 0 : i32
    %c0_i32_0 = arith.constant 0 : i32
    %c0_i32_1 = arith.constant 0 : i32
    return %c0_i32, %c0_i32_0 : i32, i32
  }
  func.func @transform_3(%arg0: i32) -> (i32, i32) {
    %c0_i32 = arith.constant 0 : i32
    %c0_i32_0 = arith.constant 0 : i32
    %c0_i32_1 = arith.constant 0 : i32
    return %c0_i32, %c0_i32_0 : i32, i32
  }
  func.func @transform_4(%arg0: i32) -> (i32, i32) {
    %c0_i32 = arith.constant 0 : i32
    %c0_i32_0 = arith.constant 0 : i32
    %c0_i32_1 = arith.constant 0 : i32
    return %c0_i32, %c0_i32_0 : i32, i32
  }
  func.func @transform_5(%arg0: i32) -> (i32, i32) {
    %c0_i32 = arith.constant 0 : i32
    %c0_i32_0 = arith.constant 0 : i32
    %c0_i32_1 = arith.constant 0 : i32
    return %c0_i32, %c0_i32_0 : i32, i32
  }
  func.func @transform_6(%arg0: i32) -> (i32, i32) {
    %c0_i32 = arith.constant 0 : i32
    %c0_i32_0 = arith.constant 0 : i32
    %c0_i32_1 = arith.constant 0 : i32
    return %c0_i32, %c0_i32_0 : i32, i32
  }
  func.func @transform_7(%arg0: i32) -> (i32, i32) {
    %c0_i32 = arith.constant 0 : i32
    %c0_i32_0 = arith.constant 0 : i32
    %c0_i32_1 = arith.constant 0 : i32
    return %c0_i32, %c0_i32_0 : i32, i32
  }
  func.func @transform_8(%arg0: i32) -> (i32, i32) {
    %c0_i32 = arith.constant 0 : i32
    %c0_i32_0 = arith.constant 0 : i32
    %c0_i32_1 = arith.constant 0 : i32
    return %c0_i32, %c0_i32_0 : i32, i32
  }
  func.func @transform_9(%arg0: i32) -> (i32, i32) {
    %c0_i32 = arith.constant 0 : i32
    %c0_i32_0 = arith.constant 0 : i32
    %c0_i32_1 = arith.constant 0 : i32
    return %c0_i32, %c0_i32_0 : i32, i32
  }
  func.func @transform_10(%arg0: i32) -> (i32, i32) {
    %c0_i32 = arith.constant 0 : i32
    %c0_i32_0 = arith.constant 0 : i32
    %c0_i32_1 = arith.constant 0 : i32
    return %c0_i32, %c0_i32_0 : i32, i32
  }
  func.func @transform_11(%arg0: i32) -> (i32, i32) {
    %c0_i32 = arith.constant 0 : i32
    %c0_i32_0 = arith.constant 0 : i32
    return %arg0, %c0_i32 : i32, i32
  }
}

</mosaic_0001>

<llo_original>
// kernel: tpu_custom_call.1
$region0: #{tpu_custom_call.1}
  #allocation0 [shape = 'u32[]', space=smem, size = 0x4, offset = 0x4, fixed_abs, tag = 'smem constant byte address 0x4 - core index']
  #allocation1 [shape = 'u32[144,128]{1,0:T(1,128)}', space=vmem, size = 0x12000, scoped, tag = 'internal scratch']
  %s0 = inlined_call_operand.hbm [shape: f32[256,128], index: 0, kind: input, shape index: {}]
  %s1 = inlined_call_operand.hbm [shape: bf16[128,128], index: 1, kind: input, shape index: {}]
  %s2 = inlined_call_operand.vmem [shape: f32[1,128], index: 2, kind: input, shape index: {}]
  %s3 = inlined_call_operand.hbm [shape: bf16[128,128], index: 3, kind: input, shape index: {}]
  %s4 = inlined_call_operand.vmem [shape: f32[1,128], index: 4, kind: input, shape index: {}]
  %s5 = inlined_call_operand.hbm [shape: bf16[128,128], index: 5, kind: input, shape index: {}]
  %s6 = inlined_call_operand.vmem [shape: f32[1,128], index: 6, kind: input, shape index: {}]
  %s7 = inlined_call_operand.hbm [shape: bf16[128,128], index: 7, kind: input, shape index: {}]
  %s8 = inlined_call_operand.vmem [shape: f32[1,128], index: 8, kind: input, shape index: {}]
  %s9 = inlined_call_operand.hbm [shape: bf16[128,256], index: 9, kind: input, shape index: {}]
  %s10 = inlined_call_operand.vmem [shape: f32[1,256], index: 10, kind: input, shape index: {}]
  %s11 = inlined_call_operand.hbm [shape: f32[256,256], index: 11, kind: output, shape index: {}]
  %s12 = sld [smem:[#allocation0]]
  $region101: #{tpu_custom_call.1} parent=0
    _
  %s14 = ssub.s32 1, %s12
  %s15 = scalar_select 0, %s14, %s12
  $region1: #{tpu_custom_call.1} parent=0
    #allocation2 [shape = 'u8[131072]{0}', space=vmem, size = 0x20000, scoped, tag = 'input window, operand 0']
    #allocation3 [shape = 's32[2]{0}', space=sflag, size = 0x8, scoped, tag = 'scoped memory for tpu_custom_call.1']
    #allocation4 [shape = 's32[2]{0}', space=sflag, size = 0x8, scoped, tag = 'scoped memory for tpu_custom_call.1']
    #allocation5 [shape = 'u8[32768]{0}', space=vmem, size = 0x8000, scoped, tag = 'input window, operand 1, single buffered']
    #allocation6 [shape = 's32[1]{0}', space=sflag, size = 0x4, scoped, tag = 'scoped memory for tpu_custom_call.1']
    #allocation7 [shape = 'u8[32768]{0}', space=vmem, size = 0x8000, scoped, tag = 'input window, operand 3, single buffered']
    #allocation8 [shape = 'u8[32768]{0}', space=vmem, size = 0x8000, scoped, tag = 'input window, operand 5, single buffered']
    #allocation9 [shape = 's32[1]{0}', space=sflag, size = 0x4, scoped, tag = 'scoped memory for tpu_custom_call.1']
    #allocation10 [shape = 'u8[32768]{0}', space=vmem, size = 0x8000, scoped, tag = 'input window, operand 7, single buffered']
    #allocation11 [shape = 'u8[65536]{0}', space=vmem, size = 0x10000, scoped, tag = 'input window, operand 9, single buffered']
    #allocation12 [shape = 's32[1]{0}', space=sflag, size = 0x4, scoped, tag = 'scoped memory for tpu_custom_call.1']
    #allocation13 [shape = 'u8[262144]{0}', space=vmem, size = 0x40000, scoped, tag = 'output window, operand 0']
    %16 = vsyncpa [#allocation3], 0
    %s17 = scalar_lea.sflag [#allocation3], 1
    %18 = vsyncpa %s17, 0
    %19 = vsyncpa [#allocation6], 0
    %20 = vsyncpa [#allocation9], 0
    %21 = vsyncpa [#allocation12], 0
    %22 = vsyncpa [#allocation4], 0
    %s23 = scalar_lea.sflag [#allocation4], 1
    %24 = vsyncpa %s23, 0
    loop: start=0, step=1, limit=4
    $region2: #{tpu_custom_call.1} parent=1 // loop_pre_header
      _
    $region3: #{tpu_custom_call.1} parent=1 // loop_header
      %s26 = sphi 0, %s30
      %p27 = scmp.ge.s32.totalorder %s26, 4
      %s36 = sphi 0, %s38
      %s39 = sphi 0, %s36
      %s40 = sphi 0, %s39
      %s56 = sphi 0, %s40
      %s60 = sphi 0, %s60
      %s62 = sphi 0, %s60
      %s63 = sphi 0, %s62
      %s77 = sphi 0, %s63
      %s81 = sphi 0, %s81
      %s83 = sphi 0, %s81
      %s84 = sphi 0, %s83
      %s98 = sphi 0, %s84
      %s102 = sphi 0, %s102
      %s104 = sphi 0, %s102
      %s105 = sphi 0, %s104
      %s119 = sphi 0, %s105
      %s123 = sphi 0, %s123
      %s125 = sphi 0, %s123
      %s126 = sphi 0, %s125
      %s140 = sphi 0, %s126
      %s144 = sphi 0, %s144
      %s146 = sphi 0, %s144
      %s147 = sphi 0, %s146
      %s161 = sphi 0, %s147
      %s165 = sphi 0, %s165
      %s167 = sphi 0, %s165
      %s168 = sphi 0, %s167
      %s182 = sphi 0, %s168
      %s186 = sphi 0, %s186
      %s188 = sphi 0, %s186
      %s189 = sphi 0, %s188
      %s203 = sphi 0, %s189
      %s207 = sphi 0, %s207
      %s209 = sphi 0, %s207
      %s210 = sphi 0, %s209
      %s224 = sphi 0, %s210
      %s228 = sphi 0, %s228
      %s230 = sphi 0, %s228
      %s231 = sphi 0, %s230
      %s245 = sphi 0, %s231
      %s249 = sphi 0, %s249
      %s251 = sphi 0, %s249
      %s252 = sphi 0, %s251
      %s266 = sphi 0, %s252
      %s272 = sphi 0, %s274
      %s275 = sphi 0, %s272
      %s276 = sphi 0, %s275
      %s292 = sphi 0, %s276
    $region4: #{tpu_custom_call.1} parent=1 // loop_header_branch
      %29 = sbr.rel (%p27) target = $region8
    $region5: #{tpu_custom_call.1} parent=1 // loop_body
      %s31 = ssub.s32 %s26, 1
      %s32 = ssub.s32 %s26, 2
      %s33 = sadd.s32 %s26, 1
      %s34 = ssub.s32 %s26, %s33
      %p35 = scmp.eq.s32.totalorder %s34, 0
      %s37 = sadd.s32 %s36, 1
      %s38 = scalar_select %p35, %s36, %s37
      %p41 = pneg %p35
      %p42 = scmp.eq.s32.totalorder %s26, 1
      %p43 = por %p41, %p42
      %p44 = scmp.ne.s32.totalorder %s36, %s39
      %p45 = scmp.eq.s32.totalorder %s26, 0
      %p46 = por %p44, %p45
      %p47 = scmp.ne.s32.totalorder %s36, %s39
      %p48 = scmp.eq.s32.totalorder %s31, 1
      %p49 = por %p47, %p48
      %p50 = scmp.ne.s32.totalorder %s39, %s40
      %p51 = scmp.eq.s32.totalorder %s31, 0
      %p52 = por %p50, %p51
      %p53 = scmp.ne.s32.totalorder %s39, %s40
      %p54 = scmp.eq.s32.totalorder %s32, 1
      %p55 = por %p53, %p54
      %p57 = scmp.ne.s32.totalorder %s40, %s56
      %p58 = scmp.eq.s32.totalorder %s32, 0
      %p59 = por %p57, %p58
      %s61 = sadd.s32 %s60, 1
      %p64 = scmp.eq.s32.totalorder %s26, 1
      %p65 = scmp.ne.s32.totalorder %s60, %s62
      %p66 = scmp.eq.s32.totalorder %s26, 0
      %p67 = por %p65, %p66
      %p68 = scmp.ne.s32.totalorder %s60, %s62
      %p69 = scmp.eq.s32.totalorder %s31, 1
      %p70 = por %p68, %p69
      %p71 = scmp.ne.s32.totalorder %s62, %s63
      %p72 = scmp.eq.s32.totalorder %s31, 0
      %p73 = por %p71, %p72
      %p74 = scmp.ne.s32.totalorder %s62, %s63
      %p75 = scmp.eq.s32.totalorder %s32, 1
      %p76 = por %p74, %p75
      %p78 = scmp.ne.s32.totalorder %s63, %s77
      %p79 = scmp.eq.s32.totalorder %s32, 0
      %p80 = por %p78, %p79
      %s82 = sadd.s32 %s81, 1
      %p85 = scmp.eq.s32.totalorder %s26, 1
      %p86 = scmp.ne.s32.totalorder %s81, %s83
      %p87 = scmp.eq.s32.totalorder %s26, 0
      %p88 = por %p86, %p87
      %p89 = scmp.ne.s32.totalorder %s81, %s83
      %p90 = scmp.eq.s32.totalorder %s31, 1
      %p91 = por %p89, %p90
      %p92 = scmp.ne.s32.totalorder %s83, %s84
      %p93 = scmp.eq.s32.totalorder %s31, 0
      %p94 = por %p92, %p93
      %p95 = scmp.ne.s32.totalorder %s83, %s84
      %p96 = scmp.eq.s32.totalorder %s32, 1
      %p97 = por %p95, %p96
      %p99 = scmp.ne.s32.totalorder %s84, %s98
      %p100 = scmp.eq.s32.totalorder %s32, 0
      %p101 = por %p99, %p100
      %s103 = sadd.s32 %s102, 1
      %p106 = scmp.eq.s32.totalorder %s26, 1
      %p107 = scmp.ne.s32.totalorder %s102, %s104
      %p108 = scmp.eq.s32.totalorder %s26, 0
      %p109 = por %p107, %p108
      %p110 = scmp.ne.s32.totalorder %s102, %s104
      %p111 = scmp.eq.s32.totalorder %s31, 1
      %p112 = por %p110, %p111
      %p113 = scmp.ne.s32.totalorder %s104, %s105
      %p114 = scmp.eq.s32.totalorder %s31, 0
      %p115 = por %p113, %p114
      %p116 = scmp.ne.s32.totalorder %s104, %s105
      %p117 = scmp.eq.s32.totalorder %s32, 1
      %p118 = por %p116, %p117
      %p120 = scmp.ne.s32.totalorder %s105, %s119
      %p121 = scmp.eq.s32.totalorder %s32, 0
      %p122 = por %p120, %p121
      %s124 = sadd.s32 %s123, 1
      %p127 = scmp.eq.s32.totalorder %s26, 1
      %p128 = scmp.ne.s32.totalorder %s123, %s125
      %p129 = scmp.eq.s32.totalorder %s26, 0
      %p130 = por %p128, %p129
      %p131 = scmp.ne.s32.totalorder %s123, %s125
      %p132 = scmp.eq.s32.totalorder %s31, 1
      %p133 = por %p131, %p132
      %p134 = scmp.ne.s32.totalorder %s125, %s126
      %p135 = scmp.eq.s32.totalorder %s31, 0
      %p136 = por %p134, %p135
      %p137 = scmp.ne.s32.totalorder %s125, %s126
      %p138 = scmp.eq.s32.totalorder %s32, 1
      %p139 = por %p137, %p138
      %p141 = scmp.ne.s32.totalorder %s126, %s140
      %p142 = scmp.eq.s32.totalorder %s32, 0
      %p143 = por %p141, %p142
      %s145 = sadd.s32 %s144, 1
      %p148 = scmp.eq.s32.totalorder %s26, 1
      %p149 = scmp.ne.s32.totalorder %s144, %s146
      %p150 = scmp.eq.s32.totalorder %s26, 0
      %p151 = por %p149, %p150
      %p152 = scmp.ne.s32.totalorder %s144, %s146
      %p153 = scmp.eq.s32.totalorder %s31, 1
      %p154 = por %p152, %p153
      %p155 = scmp.ne.s32.totalorder %s146, %s147
      %p156 = scmp.eq.s32.totalorder %s31, 0
      %p157 = por %p155, %p156
      %p158 = scmp.ne.s32.totalorder %s146, %s147
      %p159 = scmp.eq.s32.totalorder %s32, 1
      %p160 = por %p158, %p159
      %p162 = scmp.ne.s32.totalorder %s147, %s161
      %p163 = scmp.eq.s32.totalorder %s32, 0
      %p164 = por %p162, %p163
      %s166 = sadd.s32 %s165, 1
      %p169 = scmp.eq.s32.totalorder %s26, 1
      %p170 = scmp.ne.s32.totalorder %s165, %s167
      %p171 = scmp.eq.s32.totalorder %s26, 0
      %p172 = por %p170, %p171
      %p173 = scmp.ne.s32.totalorder %s165, %s167
      %p174 = scmp.eq.s32.totalorder %s31, 1
      %p175 = por %p173, %p174
      %p176 = scmp.ne.s32.totalorder %s167, %s168
      %p177 = scmp.eq.s32.totalorder %s31, 0
      %p178 = por %p176, %p177
      %p179 = scmp.ne.s32.totalorder %s167, %s168
      %p180 = scmp.eq.s32.totalorder %s32, 1
      %p181 = por %p179, %p180
      %p183 = scmp.ne.s32.totalorder %s168, %s182
      %p184 = scmp.eq.s32.totalorder %s32, 0
      %p185 = por %p183, %p184
      %s187 = sadd.s32 %s186, 1
      %p190 = scmp.eq.s32.totalorder %s26, 1
      %p191 = scmp.ne.s32.totalorder %s186, %s188
      %p192 = scmp.eq.s32.totalorder %s26, 0
      %p193 = por %p191, %p192
      %p194 = scmp.ne.s32.totalorder %s186, %s188
      %p195 = scmp.eq.s32.totalorder %s31, 1
      %p196 = por %p194, %p195
      %p197 = scmp.ne.s32.totalorder %s188, %s189
      %p198 = scmp.eq.s32.totalorder %s31, 0
      %p199 = por %p197, %p198
      %p200 = scmp.ne.s32.totalorder %s188, %s189
      %p201 = scmp.eq.s32.totalorder %s32, 1
      %p202 = por %p200, %p201
      %p204 = scmp.ne.s32.totalorder %s189, %s203
      %p205 = scmp.eq.s32.totalorder %s32, 0
      %p206 = por %p204, %p205
      %s208 = sadd.s32 %s207, 1
      %p211 = scmp.eq.s32.totalorder %s26, 1
      %p212 = scmp.ne.s32.totalorder %s207, %s209
      %p213 = scmp.eq.s32.totalorder %s26, 0
      %p214 = por %p212, %p213
      %p215 = scmp.ne.s32.totalorder %s207, %s209
      %p216 = scmp.eq.s32.totalorder %s31, 1
      %p217 = por %p215, %p216
      %p218 = scmp.ne.s32.totalorder %s209, %s210
      %p219 = scmp.eq.s32.totalorder %s31, 0
      %p220 = por %p218, %p219
      %p221 = scmp.ne.s32.totalorder %s209, %s210
      %p222 = scmp.eq.s32.totalorder %s32, 1
      %p223 = por %p221, %p222
      %p225 = scmp.ne.s32.totalorder %s210, %s224
      %p226 = scmp.eq.s32.totalorder %s32, 0
      %p227 = por %p225, %p226
      %s229 = sadd.s32 %s228, 1
      %p232 = scmp.eq.s32.totalorder %s26, 1
      %p233 = scmp.ne.s32.totalorder %s228, %s230
      %p234 = scmp.eq.s32.totalorder %s26, 0
      %p235 = por %p233, %p234
      %p236 = scmp.ne.s32.totalorder %s228, %s230
      %p237 = scmp.eq.s32.totalorder %s31, 1
      %p238 = por %p236, %p237
      %p239 = scmp.ne.s32.totalorder %s230, %s231
      %p240 = scmp.eq.s32.totalorder %s31, 0
      %p241 = por %p239, %p240
      %p242 = scmp.ne.s32.totalorder %s230, %s231
      %p243 = scmp.eq.s32.totalorder %s32, 1
      %p244 = por %p242, %p243
      %p246 = scmp.ne.s32.totalorder %s231, %s245
      %p247 = scmp.eq.s32.totalorder %s32, 0
      %p248 = por %p246, %p247
      %s250 = sadd.s32 %s249, 1
      %p253 = scmp.eq.s32.totalorder %s26, 1
      %p254 = scmp.ne.s32.totalorder %s249, %s251
      %p255 = scmp.eq.s32.totalorder %s26, 0
      %p256 = por %p254, %p255
      %p257 = scmp.ne.s32.totalorder %s249, %s251
      %p258 = scmp.eq.s32.totalorder %s31, 1
      %p259 = por %p257, %p258
      %p260 = scmp.ne.s32.totalorder %s251, %s252
      %p261 = scmp.eq.s32.totalorder %s31, 0
      %p262 = por %p260, %p261
      %p263 = scmp.ne.s32.totalorder %s251, %s252
      %p264 = scmp.eq.s32.totalorder %s32, 1
      %p265 = por %p263, %p264
      %p267 = scmp.ne.s32.totalorder %s252, %s266
      %p268 = scmp.eq.s32.totalorder %s32, 0
      %p269 = por %p267, %p268
      %s270 = ssub.s32 %s26, %s33
      %p271 = scmp.eq.s32.totalorder %s270, 0
      %s273 = sadd.s32 %s272, 1
      %s274 = scalar_select %p271, %s272, %s273
      %p277 = pneg %p271
      %p278 = scmp.eq.s32.totalorder %s26, 1
      %p279 = por %p277, %p278
      %p280 = scmp.ne.s32.totalorder %s272, %s275
      %p281 = scmp.eq.s32.totalorder %s26, 0
      %p282 = por %p280, %p281
      %p283 = scmp.ne.s32.totalorder %s272, %s275
      %p284 = scmp.eq.s32.totalorder %s31, 1
      %p285 = por %p283, %p284
      %p286 = scmp.ne.s32.totalorder %s275, %s276
      %p287 = scmp.eq.s32.totalorder %s31, 0
      %p288 = por %p286, %p287
      %p289 = scmp.ne.s32.totalorder %s275, %s276
      %p290 = scmp.eq.s32.totalorder %s32, 1
      %p291 = por %p289, %p290
      %p293 = scmp.ne.s32.totalorder %s276, %s292
      %p294 = scmp.eq.s32.totalorder %s32, 0
      %p295 = por %p293, %p294
      %p296 = scmp.le.s32.totalorder 1, %s26
      %p297 = scmp.lt.s32.totalorder %s26, 3
      %p298 = pnand %p296, %p297
      %p299 = pneg %p298
      // Predicated region
      $region9: #{tpu_custom_call.1} parent=5 // pred_check
        _
      $region10: #{tpu_custom_call.1} parent=5 // pred_check_branch
        %301 = sbr.rel (%p298) target = $region12
      $region11: #{tpu_custom_call.1} parent=5 // pred_region
        %s302 = ssub.s32 %s26, 1
        // Predicated region
        $region13: #{tpu_custom_call.1} parent=11 // pred_check
          %p303 = pneg %p73
        $region14: #{tpu_custom_call.1} parent=11 // pred_check_branch
          %305 = sbr.rel (%p303) target = $region16
        $region15: #{tpu_custom_call.1} parent=11 // pred_region
          %s307 = ssub.s32 1024, 1024
          %308 = vsyncadd [#allocation6], %s307
          %s309 = sshll.u32 [#allocation5], 4
          %s310 = int_to_ptr.vmem [resolvable:$true] %s309
          %315 = dma.hbm_to_vmem [thread:$0]  %s1, 1024, %s310, [#allocation6], 64, 64, 4
        $region16: #{tpu_custom_call.1} parent=11 // pred_fallthru
          _
        // Predicated region
        $region17: #{tpu_custom_call.1} parent=11 // pred_check
          %p316 = pneg %p94
        $region18: #{tpu_custom_call.1} parent=11 // pred_check_branch
          %318 = sbr.rel (%p316) target = $region20
        $region19: #{tpu_custom_call.1} parent=11 // pred_region
          _
        $region20: #{tpu_custom_call.1} parent=11 // pred_fallthru
          _
        // Predicated region
        $region21: #{tpu_custom_call.1} parent=11 // pred_check
          %p319 = pneg %p115
        $region22: #{tpu_custom_call.1} parent=11 // pred_check_branch
          %321 = sbr.rel (%p319) target = $region24
        $region23: #{tpu_custom_call.1} parent=11 // pred_region
          %s323 = ssub.s32 1024, 1024
          %324 = vsyncadd [#allocation6], %s323
          %s325 = sshll.u32 [#allocation7], 4
          %s326 = int_to_ptr.vmem [resolvable:$true] %s325
          %331 = dma.hbm_to_vmem [thread:$0]  %s3, 1024, %s326, [#allocation6], 64, 64, 4
        $region24: #{tpu_custom_call.1} parent=11 // pred_fallthru
          _
        // Predicated region
        $region25: #{tpu_custom_call.1} parent=11 // pred_check
          %p332 = pneg %p136
        $region26: #{tpu_custom_call.1} parent=11 // pred_check_branch
          %334 = sbr.rel (%p332) target = $region28
        $region27: #{tpu_custom_call.1} parent=11 // pred_region
          _
        $region28: #{tpu_custom_call.1} parent=11 // pred_fallthru
          _
        // Predicated region
        $region29: #{tpu_custom_call.1} parent=11 // pred_check
          %p335 = pneg %p157
        $region30: #{tpu_custom_call.1} parent=11 // pred_check_branch
          %337 = sbr.rel (%p335) target = $region32
        $region31: #{tpu_custom_call.1} parent=11 // pred_region
          %s339 = ssub.s32 1024, 1024
          %340 = vsyncadd [#allocation9], %s339
          %s341 = sshll.u32 [#allocation8], 4
          %s342 = int_to_ptr.vmem [resolvable:$true] %s341
          %347 = dma.hbm_to_vmem [thread:$0]  %s5, 1024, %s342, [#allocation9], 64, 64, 4
        $region32: #{tpu_custom_call.1} parent=11 // pred_fallthru
          _
        // Predicated region
        $region33: #{tpu_custom_call.1} parent=11 // pred_check
          %p348 = pneg %p178
        $region34: #{tpu_custom_call.1} parent=11 // pred_check_branch
          %350 = sbr.rel (%p348) target = $region36
        $region35: #{tpu_custom_call.1} parent=11 // pred_region
          _
        $region36: #{tpu_custom_call.1} parent=11 // pred_fallthru
          _
        // Predicated region
        $region37: #{tpu_custom_call.1} parent=11 // pred_check
          %p351 = pneg %p199
        $region38: #{tpu_custom_call.1} parent=11 // pred_check_branch
          %353 = sbr.rel (%p351) target = $region40
        $region39: #{tpu_custom_call.1} parent=11 // pred_region
          %s355 = ssub.s32 1024, 1024
          %356 = vsyncadd [#allocation9], %s355
          %s357 = sshll.u32 [#allocation10], 4
          %s358 = int_to_ptr.vmem [resolvable:$true] %s357
          %363 = dma.hbm_to_vmem [thread:$0]  %s7, 1024, %s358, [#allocation9], 64, 64, 4
        $region40: #{tpu_custom_call.1} parent=11 // pred_fallthru
          _
        // Predicated region
        $region41: #{tpu_custom_call.1} parent=11 // pred_check
          %p364 = pneg %p220
        $region42: #{tpu_custom_call.1} parent=11 // pred_check_branch
          %366 = sbr.rel (%p364) target = $region44
        $region43: #{tpu_custom_call.1} parent=11 // pred_region
          _
        $region44: #{tpu_custom_call.1} parent=11 // pred_fallthru
          _
        // Predicated region
        $region45: #{tpu_custom_call.1} parent=11 // pred_check
          %p367 = pneg %p241
        $region46: #{tpu_custom_call.1} parent=11 // pred_check_branch
          %369 = sbr.rel (%p367) target = $region48
        $region47: #{tpu_custom_call.1} parent=11 // pred_region
          %s371 = ssub.s32 2048, 2048
          %372 = vsyncadd [#allocation12], %s371
          %s373 = sshll.u32 [#allocation11], 4
          %s374 = int_to_ptr.vmem [resolvable:$true] %s373
          %379 = dma.hbm_to_vmem [thread:$0]  %s9, 2048, %s374, [#allocation12], 128, 128, 8
        $region48: #{tpu_custom_call.1} parent=11 // pred_fallthru
          _
        // Predicated region
        $region49: #{tpu_custom_call.1} parent=11 // pred_check
          %p380 = pneg %p262
        $region50: #{tpu_custom_call.1} parent=11 // pred_check_branch
          %382 = sbr.rel (%p380) target = $region52
        $region51: #{tpu_custom_call.1} parent=11 // pred_region
          _
        $region52: #{tpu_custom_call.1} parent=11 // pred_fallthru
          _
      $region12: #{tpu_custom_call.1} parent=5 // pred_fallthru
        _
      %p383 = scmp.lt.s32.totalorder %s26, 2
      // Predicated region
      $region53: #{tpu_custom_call.1} parent=5 // pred_check
        %p384 = pneg %p383
      $region54: #{tpu_custom_call.1} parent=5 // pred_check_branch
        %386 = sbr.rel (%p384) target = $region56
      $region55: #{tpu_custom_call.1} parent=5 // pred_region
        // Predicated region
        $region57: #{tpu_custom_call.1} parent=55 // pred_check
          %p387 = pneg %p46
        $region58: #{tpu_custom_call.1} parent=55 // pred_check_branch
          %389 = sbr.rel (%p387) target = $region60
        $region59: #{tpu_custom_call.1} parent=55 // pred_region
          %s390 = sand.u32 %s36, 1
          %s391 = scalar_lea.sflag [#allocation3], %s390
          %s392 = sand.u32 %s36, 1
          %s393 = smul.addr %s392, 128
          %s394 = scalar_lea.vmem [#allocation2], %s393
          %s395 = smul.u32 16, %s26
          %s397 = ssub.s32 2048, 2048
          %398 = vsyncadd %s391, %s397
          %s399 = smul.addr %s395, 128
          %s400 = scalar_lea.hbm %s0, %s399
          %s401 = sshll.u32 %s394, 4
          %s402 = int_to_ptr.vmem [resolvable:$true] %s401
          %407 = dma.hbm_to_vmem [thread:$0]  %s400, 2048, %s402, %s391, 128, 128, 8
        $region60: #{tpu_custom_call.1} parent=55 // pred_fallthru
          _
      $region56: #{tpu_custom_call.1} parent=5 // pred_fallthru
        _
      %p408 = scmp.le.s32.totalorder 1, %s26
      %p409 = scmp.lt.s32.totalorder %s26, 3
      %p410 = pnand %p408, %p409
      %p411 = pneg %p410
      // Predicated region
      $region61: #{tpu_custom_call.1} parent=5 // pred_check
        _
      $region62: #{tpu_custom_call.1} parent=5 // pred_check_branch
        %413 = sbr.rel (%p410) target = $region64
      $region63: #{tpu_custom_call.1} parent=5 // pred_region
        %s414 = ssub.s32 %s26, 1
        %s415 = sand.u32 %s39, 1
        %s416 = scalar_lea.sflag [#allocation3], %s415
        %s417 = sand.u32 %s39, 1
        %s418 = smul.addr %s417, 128
        %s419 = scalar_lea.vmem [#allocation2], %s418
        // Predicated region
        $region65: #{tpu_custom_call.1} parent=63 // pred_check
          %p420 = pneg %p52
        $region66: #{tpu_custom_call.1} parent=63 // pred_check_branch
          %422 = sbr.rel (%p420) target = $region68
        $region67: #{tpu_custom_call.1} parent=63 // pred_region
          %423 = dma.done %s416, 2048
        $region68: #{tpu_custom_call.1} parent=63 // pred_fallthru
          _
        // Predicated region
        $region69: #{tpu_custom_call.1} parent=63 // pred_check
          %p424 = pneg %p73
        $region70: #{tpu_custom_call.1} parent=63 // pred_check_branch
          %426 = sbr.rel (%p424) target = $region72
        $region71: #{tpu_custom_call.1} parent=63 // pred_region
          %427 = dma.done [#allocation6], 1024
        $region72: #{tpu_custom_call.1} parent=63 // pred_fallthru
          _
        // Predicated region
        $region73: #{tpu_custom_call.1} parent=63 // pred_check
          %p428 = pneg %p115
        $region74: #{tpu_custom_call.1} parent=63 // pred_check_branch
          %430 = sbr.rel (%p428) target = $region76
        $region75: #{tpu_custom_call.1} parent=63 // pred_region
          %431 = dma.done [#allocation6], 1024
        $region76: #{tpu_custom_call.1} parent=63 // pred_fallthru
          _
        // Predicated region
        $region77: #{tpu_custom_call.1} parent=63 // pred_check
          %p432 = pneg %p157
        $region78: #{tpu_custom_call.1} parent=63 // pred_check_branch
          %434 = sbr.rel (%p432) target = $region80
        $region79: #{tpu_custom_call.1} parent=63 // pred_region
          %435 = dma.done [#allocation9], 1024
        $region80: #{tpu_custom_call.1} parent=63 // pred_fallthru
          _
        // Predicated region
        $region81: #{tpu_custom_call.1} parent=63 // pred_check
          %p436 = pneg %p199
        $region82: #{tpu_custom_call.1} parent=63 // pred_check_branch
          %438 = sbr.rel (%p436) target = $region84
        $region83: #{tpu_custom_call.1} parent=63 // pred_region
          %439 = dma.done [#allocation9], 1024
        $region84: #{tpu_custom_call.1} parent=63 // pred_fallthru
          _
        // Predicated region
        $region85: #{tpu_custom_call.1} parent=63 // pred_check
          %p440 = pneg %p241
        $region86: #{tpu_custom_call.1} parent=63 // pred_check_branch
          %442 = sbr.rel (%p440) target = $region88
        $region87: #{tpu_custom_call.1} parent=63 // pred_region
          %443 = dma.done [#allocation12], 2048
        $region88: #{tpu_custom_call.1} parent=63 // pred_fallthru
          _
        %s444 = sand.u32 %s39, 1
        %s445 = scalar_lea.sflag [#allocation3], %s444
        %s446 = sand.u32 %s39, 1
        %s447 = smul.addr %s446, 128
        %s448 = scalar_lea.vmem [#allocation2], %s447
        %p449 = pneg %p52
        %p450 = pneg %p49
        %p451 = pneg %p73
        %p452 = pneg %p70
        %p453 = pneg %p94
        %p454 = pneg %p91
        %p455 = pneg %p115
        %p456 = pneg %p112
        %p457 = pneg %p136
        %p458 = pneg %p133
        %p459 = pneg %p157
        %p460 = pneg %p154
        %p461 = pneg %p178
        %p462 = pneg %p175
        %p463 = pneg %p199
        %p464 = pneg %p196
        %p465 = pneg %p220
        %p466 = pneg %p217
        %p467 = pneg %p241
        %p468 = pneg %p238
        %p469 = pneg %p262
        %p470 = pneg %p259
        %p471 = pneg %p288
        %p472 = pneg %p285
        %s473 = sand.u32 %s275, 1
        %s474 = scalar_lea.sflag [#allocation4], %s473
        %s475 = sand.u32 %s275, 1
        %s476 = smul.addr %s475, 256
        %s477 = scalar_lea.vmem [#allocation13], %s476
        %s478 = smul.u32 16, %s31
        %s479 = smul.u32 16, %s31
        %v481 = vld [vmem:[%s419] sm:$0xff]
        %v482 = vld [vmem:[%s419 + $0x8] sm:$0xff]
        %v483 = vld [vmem:[%s419 + $0x10] sm:$0xff]
        %v484 = vld [vmem:[%s419 + $0x18] sm:$0xff]
        %v485 = vld [vmem:[%s419 + $0x20] sm:$0xff]
        %v486 = vld [vmem:[%s419 + $0x28] sm:$0xff]
        %v487 = vld [vmem:[%s419 + $0x30] sm:$0xff]
        %v488 = vld [vmem:[%s419 + $0x38] sm:$0xff]
        %v489 = vld [vmem:[%s419 + $0x40] sm:$0xff]
        %v490 = vld [vmem:[%s419 + $0x48] sm:$0xff]
        %v491 = vld [vmem:[%s419 + $0x50] sm:$0xff]
        %v492 = vld [vmem:[%s419 + $0x58] sm:$0xff]
        %v493 = vld [vmem:[%s419 + $0x60] sm:$0xff]
        %v494 = vld [vmem:[%s419 + $0x68] sm:$0xff]
        %v495 = vld [vmem:[%s419 + $0x70] sm:$0xff]
        %v496 = vld [vmem:[%s419 + $0x78] sm:$0xff]
        %v497 = vpack.c.bf16 %v482, %v481
        %v498 = vpack.c.bf16 %v484, %v483
        %v499 = vpack.c.bf16 %v486, %v485
        %v500 = vpack.c.bf16 %v488, %v487
        %v501 = vpack.c.bf16 %v490, %v489
        %v502 = vpack.c.bf16 %v492, %v491
        %v503 = vpack.c.bf16 %v494, %v493
        %v504 = vpack.c.bf16 %v496, %v495
        %v505 = vld [vmem:[#allocation5] sm:$0xf]
        %v506 = vld [vmem:[#allocation5 + $0x4] sm:$0xf]
        %v507 = vld [vmem:[#allocation5 + $0x8] sm:$0xf]
        %v508 = vld [vmem:[#allocation5 + $0xc] sm:$0xf]
        %v509 = vld [vmem:[#allocation5 + $0x10] sm:$0xf]
        %v510 = vld [vmem:[#allocation5 + $0x14] sm:$0xf]
        %v511 = vld [vmem:[#allocation5 + $0x18] sm:$0xf]
        %v512 = vld [vmem:[#allocation5 + $0x1c] sm:$0xf]
        %v513 = vld [vmem:[#allocation5 + $0x20] sm:$0xf]
        %v514 = vld [vmem:[#allocation5 + $0x24] sm:$0xf]
        %v515 = vld [vmem:[#allocation5 + $0x28] sm:$0xf]
        %v516 = vld [vmem:[#allocation5 + $0x2c] sm:$0xf]
        %v517 = vld [vmem:[#allocation5 + $0x30] sm:$0xf]
        %v518 = vld [vmem:[#allocation5 + $0x34] sm:$0xf]
        %v519 = vld [vmem:[#allocation5 + $0x38] sm:$0xf]
        %v520 = vld [vmem:[#allocation5 + $0x3c] sm:$0xf]
        %v521 = vld [vmem:[%s2] sm:$0x1]
        %v523 = vlaneseq
        %v524 = vshrl.u32 %v523, 7
        %v525 = vsub.s32 0, %v524
        %v526 = vrot.slane %v521, %v525
        %v544 = vunpack.c.l.b16 %v505
        %v545 = vunpack.c.l.b16 %v506
        %v546 = vunpack.c.l.b16 %v507
        %v547 = vunpack.c.l.b16 %v508
        %v548 = vunpack.c.l.b16 %v509
        %v549 = vunpack.c.l.b16 %v510
        %v550 = vunpack.c.l.b16 %v511
        %v551 = vunpack.c.l.b16 %v512
        %v552 = vunpack.c.l.b16 %v513
        %v553 = vunpack.c.l.b16 %v514
        %v554 = vunpack.c.l.b16 %v515
        %v555 = vunpack.c.l.b16 %v516
        %v556 = vunpack.c.l.b16 %v517
        %v557 = vunpack.c.l.b16 %v518
        %v558 = vunpack.c.l.b16 %v519
        %v559 = vunpack.c.l.b16 %v520
        %v560 = vpack.c.b16 %v545, %v544
        %v561 = vpack.c.b16 %v547, %v546
        %v562 = vpack.c.b16 %v549, %v548
        %v563 = vpack.c.b16 %v551, %v550
        %v564 = vpack.c.b16 %v553, %v552
        %v565 = vpack.c.b16 %v555, %v554
        %v566 = vpack.c.b16 %v557, %v556
        %v567 = vpack.c.b16 %v559, %v558
        %576 = vmatprep.subr.bf16.mxu0 0
        %577 = vmatpush1.bf16.msra.mxu0 %v560
        %578 = vmatprep.subr.bf16.mxu0 0
        %579 = vmatpush1.bf16.msra.mxu0 %v561
        %580 = vmatprep.subr.bf16.mxu0 0
        %581 = vmatpush1.bf16.msra.mxu0 %v562
        %582 = vmatprep.subr.bf16.mxu0 0
        %583 = vmatpush1.bf16.msra.mxu0 %v563
        %584 = vmatprep.subr.bf16.mxu0 0
        %585 = vmatpush1.bf16.msra.mxu0 %v564
        %586 = vmatprep.subr.bf16.mxu0 0
        %587 = vmatpush1.bf16.msra.mxu0 %v565
        %588 = vmatprep.subr.bf16.mxu0 0
        %589 = vmatpush1.bf16.msra.mxu0 %v566
        %590 = vmatprep.subr.bf16.mxu0 0
        %591 = vmatpush1.bf16.msra.mxu0 %v567
        %592 = vmatprep.subr.bf16.mxu0 0
        %593 = vmatpush1.bf16.msra.mxu0 0
        %594 = vmatprep.subr.bf16.mxu0 0
        %595 = vmatpush1.bf16.msra.mxu0 0
        %596 = vmatprep.subr.bf16.mxu0 0
        %597 = vmatpush1.bf16.msra.mxu0 0
        %598 = vmatprep.subr.bf16.mxu0 0
        %599 = vmatpush1.bf16.msra.mxu0 0
        %600 = vmatprep.subr.bf16.mxu0 0
        %601 = vmatpush1.bf16.msra.mxu0 0
        %602 = vmatprep.subr.bf16.mxu0 0
        %603 = vmatpush1.bf16.msra.mxu0 0
        %604 = vmatprep.subr.bf16.mxu0 0
        %605 = vmatpush1.bf16.msra.mxu0 0
        %606 = vmatprep.subr.bf16.mxu0 0
        %607 = vmatpush1.bf16.msra.mxu0 0
        %608 = vmatprep.mubr.bf16.mxu0 0
        %609 = vmatmul.mubr.bf16.gmra.mrb[0].mxu0 %v497
        %v610 = vpop.f32.mrb[0].mxu0
        %v611 = vadd.f32 %v526, %v610
        %v612 = vpop.f32.mrb[0].mxu0
        %v613 = vpop.f32.mrb[0].mxu0
        %v614 = vadd.f32 %v526, %v613
        %v615 = vpop.f32.mrb[0].mxu0
        %616 = vmatprep.mubr.bf16.mxu0 0
        %617 = vmatmul.mubr.bf16.gmra.mrb[0].mxu0 %v498
        %v618 = vpop.f32.mrb[0].mxu0
        %v619 = vadd.f32 %v526, %v618
        %v620 = vpop.f32.mrb[0].mxu0
        %v621 = vpop.f32.mrb[0].mxu0
        %v622 = vadd.f32 %v526, %v621
        %v623 = vpop.f32.mrb[0].mxu0
        %624 = vmatprep.mubr.bf16.mxu0 0
        %625 = vmatmul.mubr.bf16.gmra.mrb[0].mxu0 %v499
        %v626 = vpop.f32.mrb[0].mxu0
        %v627 = vadd.f32 %v526, %v626
        %v628 = vpop.f32.mrb[0].mxu0
        %v629 = vpop.f32.mrb[0].mxu0
        %v630 = vadd.f32 %v526, %v629
        %v631 = vpop.f32.mrb[0].mxu0
        %632 = vmatprep.mubr.bf16.mxu0 0
        %633 = vmatmul.mubr.bf16.gmra.mrb[0].mxu0 %v500
        %v634 = vpop.f32.mrb[0].mxu0
        %v635 = vadd.f32 %v526, %v634
        %v636 = vpop.f32.mrb[0].mxu0
        %v637 = vpop.f32.mrb[0].mxu0
        %v638 = vadd.f32 %v526, %v637
        %v639 = vpop.f32.mrb[0].mxu0
        %640 = vmatprep.mubr.bf16.mxu0 0
        %641 = vmatmul.mubr.bf16.gmra.mrb[0].mxu0 %v501
        %v642 = vpop.f32.mrb[0].mxu0
        %v643 = vadd.f32 %v526, %v642
        %v644 = vpop.f32.mrb[0].mxu0
        %v645 = vpop.f32.mrb[0].mxu0
        %v646 = vadd.f32 %v526, %v645
        %v647 = vpop.f32.mrb[0].mxu0
        %648 = vmatprep.mubr.bf16.mxu0 0
        %649 = vmatmul.mubr.bf16.gmra.mrb[0].mxu0 %v502
        %v650 = vpop.f32.mrb[0].mxu0
        %v651 = vadd.f32 %v526, %v650
        %v652 = vpop.f32.mrb[0].mxu0
        %v653 = vpop.f32.mrb[0].mxu0
        %v654 = vadd.f32 %v526, %v653
        %v655 = vpop.f32.mrb[0].mxu0
        %656 = vmatprep.mubr.bf16.mxu0 0
        %657 = vmatmul.mubr.bf16.gmra.mrb[0].mxu0 %v503
        %v658 = vpop.f32.mrb[0].mxu0
        %v659 = vadd.f32 %v526, %v658
        %v660 = vpop.f32.mrb[0].mxu0
        %v661 = vpop.f32.mrb[0].mxu0
        %v662 = vadd.f32 %v526, %v661
        %v663 = vpop.f32.mrb[0].mxu0
        %664 = vmatprep.mubr.bf16.mxu0 0
        %665 = vmatmul.mubr.bf16.gmra.mrb[0].mxu0 %v504
        %v666 = vpop.f32.mrb[0].mxu0
        %v667 = vadd.f32 %v526, %v666
        %v668 = vpop.f32.mrb[0].mxu0
        %v669 = vpop.f32.mrb[0].mxu0
        %v670 = vadd.f32 %v526, %v669
        %v671 = vpop.f32.mrb[0].mxu0
        %672 = vdwg.mxu0
        %v673 = vmul.f32 %v611, 0.5
        %v674 = vmul.f32 %v614, 0.5
        %v675 = vmul.f32 %v619, 0.5
        %v676 = vmul.f32 %v622, 0.5
        %v677 = vmul.f32 %v627, 0.5
        %v678 = vmul.f32 %v630, 0.5
        %v679 = vmul.f32 %v635, 0.5
        %v680 = vmul.f32 %v638, 0.5
        %v681 = vmul.f32 %v643, 0.5
        %v682 = vmul.f32 %v646, 0.5
        %v683 = vmul.f32 %v651, 0.5
        %v684 = vmul.f32 %v654, 0.5
        %v685 = vmul.f32 %v659, 0.5
        %v686 = vmul.f32 %v662, 0.5
        %v687 = vmul.f32 %v667, 0.5
        %v688 = vmul.f32 %v670, 0.5
        %v689 = vmul.f32 %v611, 0.044715
        %v690 = vmul.f32 %v614, 0.044715
        %v691 = vmul.f32 %v619, 0.044715
        %v692 = vmul.f32 %v622, 0.044715
        %v693 = vmul.f32 %v627, 0.044715
        %v694 = vmul.f32 %v630, 0.044715
        %v695 = vmul.f32 %v635, 0.044715
        %v696 = vmul.f32 %v638, 0.044715
        %v697 = vmul.f32 %v643, 0.044715
        %v698 = vmul.f32 %v646, 0.044715
        %v699 = vmul.f32 %v651, 0.044715
        %v700 = vmul.f32 %v654, 0.044715
        %v701 = vmul.f32 %v659, 0.044715
        %v702 = vmul.f32 %v662, 0.044715
        %v703 = vmul.f32 %v667, 0.044715
        %v704 = vmul.f32 %v670, 0.044715
        %v705 = vmul.f32 %v689, %v611
        %v706 = vmul.f32 %v690, %v614
        %v707 = vmul.f32 %v691, %v619
        %v708 = vmul.f32 %v692, %v622
        %v709 = vmul.f32 %v693, %v627
        %v710 = vmul.f32 %v694, %v630
        %v711 = vmul.f32 %v695, %v635
        %v712 = vmul.f32 %v696, %v638
        %v713 = vmul.f32 %v697, %v643
        %v714 = vmul.f32 %v698, %v646
        %v715 = vmul.f32 %v699, %v651
        %v716 = vmul.f32 %v700, %v654
        %v717 = vmul.f32 %v701, %v659
        %v718 = vmul.f32 %v702, %v662
        %v719 = vmul.f32 %v703, %v667
        %v720 = vmul.f32 %v704, %v670
        %v721 = vmul.f32 %v705, %v611
        %v722 = vmul.f32 %v706, %v614
        %v723 = vmul.f32 %v707, %v619
        %v724 = vmul.f32 %v708, %v622
        %v725 = vmul.f32 %v709, %v627
        %v726 = vmul.f32 %v710, %v630
        %v727 = vmul.f32 %v711, %v635
        %v728 = vmul.f32 %v712, %v638
        %v729 = vmul.f32 %v713, %v643
        %v730 = vmul.f32 %v714, %v646
        %v731 = vmul.f32 %v715, %v651
        %v732 = vmul.f32 %v716, %v654
        %v733 = vmul.f32 %v717, %v659
        %v734 = vmul.f32 %v718, %v662
        %v735 = vmul.f32 %v719, %v667
        %v736 = vmul.f32 %v720, %v670
        %v737 = vadd.f32 %v611, %v721
        %v738 = vadd.f32 %v614, %v722
        %v739 = vadd.f32 %v619, %v723
        %v740 = vadd.f32 %v622, %v724
        %v741 = vadd.f32 %v627, %v725
        %v742 = vadd.f32 %v630, %v726
        %v743 = vadd.f32 %v635, %v727
        %v744 = vadd.f32 %v638, %v728
        %v745 = vadd.f32 %v643, %v729
        %v746 = vadd.f32 %v646, %v730
        %v747 = vadd.f32 %v651, %v731
        %v748 = vadd.f32 %v654, %v732
        %v749 = vadd.f32 %v659, %v733
        %v750 = vadd.f32 %v662, %v734
        %v751 = vadd.f32 %v667, %v735
        %v752 = vadd.f32 %v670, %v736
        %v753 = vmul.f32 %v737, 0.7978846
        %v754 = vmul.f32 %v738, 0.7978846
        %v755 = vmul.f32 %v739, 0.7978846
        %v756 = vmul.f32 %v740, 0.7978846
        %v757 = vmul.f32 %v741, 0.7978846
        %v758 = vmul.f32 %v742, 0.7978846
        %v759 = vmul.f32 %v743, 0.7978846
        %v760 = vmul.f32 %v744, 0.7978846
        %v761 = vmul.f32 %v745, 0.7978846
        %v762 = vmul.f32 %v746, 0.7978846
        %v763 = vmul.f32 %v747, 0.7978846
        %v764 = vmul.f32 %v748, 0.7978846
        %v765 = vmul.f32 %v749, 0.7978846
        %v766 = vmul.f32 %v750, 0.7978846
        %v767 = vmul.f32 %v751, 0.7978846
        %v768 = vmul.f32 %v752, 0.7978846
        %v769 = vtanh.pop %v753
        %v770 = vtanh.pop %v754
        %v771 = vtanh.pop %v755
        %v772 = vtanh.pop %v756
        %v773 = vtanh.pop %v757
        %v774 = vtanh.pop %v758
        %v775 = vtanh.pop %v759
        %v776 = vtanh.pop %v760
        %v777 = vtanh.pop %v761
        %v778 = vtanh.pop %v762
        %v779 = vtanh.pop %v763
        %v780 = vtanh.pop %v764
        %v781 = vtanh.pop %v765
        %v782 = vtanh.pop %v766
        %v783 = vtanh.pop %v767
        %v784 = vtanh.pop %v768
        %v785 = vadd.f32 %v769, 1.0
        %v786 = vadd.f32 %v770, 1.0
        %v787 = vadd.f32 %v771, 1.0
        %v788 = vadd.f32 %v772, 1.0
        %v789 = vadd.f32 %v773, 1.0
        %v790 = vadd.f32 %v774, 1.0
        %v791 = vadd.f32 %v775, 1.0
        %v792 = vadd.f32 %v776, 1.0
        %v793 = vadd.f32 %v777, 1.0
        %v794 = vadd.f32 %v778, 1.0
        %v795 = vadd.f32 %v779, 1.0
        %v796 = vadd.f32 %v780, 1.0
        %v797 = vadd.f32 %v781, 1.0
        %v798 = vadd.f32 %v782, 1.0
        %v799 = vadd.f32 %v783, 1.0
        %v800 = vadd.f32 %v784, 1.0
        %v801 = vmul.f32 %v673, %v785
        %v802 = vmul.f32 %v674, %v786
        %v803 = vmul.f32 %v675, %v787
        %v804 = vmul.f32 %v676, %v788
        %v805 = vmul.f32 %v677, %v789
        %v806 = vmul.f32 %v678, %v790
        %v807 = vmul.f32 %v679, %v791
        %v808 = vmul.f32 %v680, %v792
        %v809 = vmul.f32 %v681, %v793
        %v810 = vmul.f32 %v682, %v794
        %v811 = vmul.f32 %v683, %v795
        %v812 = vmul.f32 %v684, %v796
        %v813 = vmul.f32 %v685, %v797
        %v814 = vmul.f32 %v686, %v798
        %v815 = vmul.f32 %v687, %v799
        %v816 = vmul.f32 %v688, %v800
        %v817 = vadd.f32 %v481, %v801
        %v818 = vadd.f32 %v482, %v802
        %v819 = vadd.f32 %v483, %v803
        %v820 = vadd.f32 %v484, %v804
        %v821 = vadd.f32 %v485, %v805
        %v822 = vadd.f32 %v486, %v806
        %v823 = vadd.f32 %v487, %v807
        %v824 = vadd.f32 %v488, %v808
        %v825 = vadd.f32 %v489, %v809
        %v826 = vadd.f32 %v490, %v810
        %v827 = vadd.f32 %v491, %v811
        %v828 = vadd.f32 %v492, %v812
        %v829 = vadd.f32 %v493, %v813
        %v830 = vadd.f32 %v494, %v814
        %v831 = vadd.f32 %v495, %v815
        %v832 = vadd.f32 %v496, %v816
        %v833 = vpack.c.bf16 %v818, %v817
        %v834 = vpack.c.bf16 %v820, %v819
        %v835 = vpack.c.bf16 %v822, %v821
        %v836 = vpack.c.bf16 %v824, %v823
        %v837 = vpack.c.bf16 %v826, %v825
        %v838 = vpack.c.bf16 %v828, %v827
        %v839 = vpack.c.bf16 %v830, %v829
        %v840 = vpack.c.bf16 %v832, %v831
        %v841 = vld [vmem:[#allocation7] sm:$0xf]
        %v842 = vld [vmem:[#allocation7 + $0x4] sm:$0xf]
        %v843 = vld [vmem:[#allocation7 + $0x8] sm:$0xf]
        %v844 = vld [vmem:[#allocation7 + $0xc] sm:$0xf]
        %v845 = vld [vmem:[#allocation7 + $0x10] sm:$0xf]
        %v846 = vld [vmem:[#allocation7 + $0x14] sm:$0xf]
        %v847 = vld [vmem:[#allocation7 + $0x18] sm:$0xf]
        %v848 = vld [vmem:[#allocation7 + $0x1c] sm:$0xf]
        %v849 = vld [vmem:[#allocation7 + $0x20] sm:$0xf]
        %v850 = vld [vmem:[#allocation7 + $0x24] sm:$0xf]
        %v851 = vld [vmem:[#allocation7 + $0x28] sm:$0xf]
        %v852 = vld [vmem:[#allocation7 + $0x2c] sm:$0xf]
        %v853 = vld [vmem:[#allocation7 + $0x30] sm:$0xf]
        %v854 = vld [vmem:[#allocation7 + $0x34] sm:$0xf]
        %v855 = vld [vmem:[#allocation7 + $0x38] sm:$0xf]
        %v856 = vld [vmem:[#allocation7 + $0x3c] sm:$0xf]
        %v857 = vld [vmem:[%s4] sm:$0x1]
        %v859 = vlaneseq
        %v860 = vshrl.u32 %v859, 7
        %v861 = vsub.s32 0, %v860
        %v862 = vrot.slane %v857, %v861
        %v880 = vunpack.c.l.b16 %v841
        %v881 = vunpack.c.l.b16 %v842
        %v882 = vunpack.c.l.b16 %v843
        %v883 = vunpack.c.l.b16 %v844
        %v884 = vunpack.c.l.b16 %v845
        %v885 = vunpack.c.l.b16 %v846
        %v886 = vunpack.c.l.b16 %v847
        %v887 = vunpack.c.l.b16 %v848
        %v888 = vunpack.c.l.b16 %v849
        %v889 = vunpack.c.l.b16 %v850
        %v890 = vunpack.c.l.b16 %v851
        %v891 = vunpack.c.l.b16 %v852
        %v892 = vunpack.c.l.b16 %v853
        %v893 = vunpack.c.l.b16 %v854
        %v894 = vunpack.c.l.b16 %v855
        %v895 = vunpack.c.l.b16 %v856
        %v896 = vpack.c.b16 %v881, %v880
        %v897 = vpack.c.b16 %v883, %v882
        %v898 = vpack.c.b16 %v885, %v884
        %v899 = vpack.c.b16 %v887, %v886
        %v900 = vpack.c.b16 %v889, %v888
        %v901 = vpack.c.b16 %v891, %v890
        %v902 = vpack.c.b16 %v893, %v892
        %v903 = vpack.c.b16 %v895, %v894
        %912 = vmatprep.subr.bf16.mxu0 0
        %913 = vmatpush1.bf16.msra.mxu0 %v896
        %914 = vmatprep.subr.bf16.mxu0 0
        %915 = vmatpush1.bf16.msra.mxu0 %v897
        %916 = vmatprep.subr.bf16.mxu0 0
        %917 = vmatpush1.bf16.msra.mxu0 %v898
        %918 = vmatprep.subr.bf16.mxu0 0
        %919 = vmatpush1.bf16.msra.mxu0 %v899
        %920 = vmatprep.subr.bf16.mxu0 0
        %921 = vmatpush1.bf16.msra.mxu0 %v900
        %922 = vmatprep.subr.bf16.mxu0 0
        %923 = vmatpush1.bf16.msra.mxu0 %v901
        %924 = vmatprep.subr.bf16.mxu0 0
        %925 = vmatpush1.bf16.msra.mxu0 %v902
        %926 = vmatprep.subr.bf16.mxu0 0
        %927 = vmatpush1.bf16.msra.mxu0 %v903
        %928 = vmatprep.subr.bf16.mxu0 0
        %929 = vmatpush1.bf16.msra.mxu0 0
        %930 = vmatprep.subr.bf16.mxu0 0
        %931 = vmatpush1.bf16.msra.mxu0 0
        %932 = vmatprep.subr.bf16.mxu0 0
        %933 = vmatpush1.bf16.msra.mxu0 0
        %934 = vmatprep.subr.bf16.mxu0 0
        %935 = vmatpush1.bf16.msra.mxu0 0
        %936 = vmatprep.subr.bf16.mxu0 0
        %937 = vmatpush1.bf16.msra.mxu0 0
        %938 = vmatprep.subr.bf16.mxu0 0
        %939 = vmatpush1.bf16.msra.mxu0 0
        %940 = vmatprep.subr.bf16.mxu0 0
        %941 = vmatpush1.bf16.msra.mxu0 0
        %942 = vmatprep.subr.bf16.mxu0 0
        %943 = vmatpush1.bf16.msra.mxu0 0
        %944 = vmatprep.mubr.bf16.mxu0 0
        %945 = vmatmul.mubr.bf16.gmra.mrb[0].mxu0 %v833
        %v946 = vpop.f32.mrb[0].mxu0
        %v947 = vadd.f32 %v862, %v946
        %v948 = vpop.f32.mrb[0].mxu0
        %v949 = vpop.f32.mrb[0].mxu0
        %v950 = vadd.f32 %v862, %v949
        %v951 = vpop.f32.mrb[0].mxu0
        %952 = vmatprep.mubr.bf16.mxu0 0
        %953 = vmatmul.mubr.bf16.gmra.mrb[0].mxu0 %v834
        %v954 = vpop.f32.mrb[0].mxu0
        %v955 = vadd.f32 %v862, %v954
        %v956 = vpop.f32.mrb[0].mxu0
        %v957 = vpop.f32.mrb[0].mxu0
        %v958 = vadd.f32 %v862, %v957
        %v959 = vpop.f32.mrb[0].mxu0
        %960 = vmatprep.mubr.bf16.mxu0 0
        %961 = vmatmul.mubr.bf16.gmra.mrb[0].mxu0 %v835
        %v962 = vpop.f32.mrb[0].mxu0
        %v963 = vadd.f32 %v862, %v962
        %v964 = vpop.f32.mrb[0].mxu0
        %v965 = vpop.f32.mrb[0].mxu0
        %v966 = vadd.f32 %v862, %v965
        %v967 = vpop.f32.mrb[0].mxu0
        %968 = vmatprep.mubr.bf16.mxu0 0
        %969 = vmatmul.mubr.bf16.gmra.mrb[0].mxu0 %v836
        %v970 = vpop.f32.mrb[0].mxu0
        %v971 = vadd.f32 %v862, %v970
        %v972 = vpop.f32.mrb[0].mxu0
        %v973 = vpop.f32.mrb[0].mxu0
        %v974 = vadd.f32 %v862, %v973
        %v975 = vpop.f32.mrb[0].mxu0
        %976 = vmatprep.mubr.bf16.mxu0 0
        %977 = vmatmul.mubr.bf16.gmra.mrb[0].mxu0 %v837
        %v978 = vpop.f32.mrb[0].mxu0
        %v979 = vadd.f32 %v862, %v978
        %v980 = vpop.f32.mrb[0].mxu0
        %v981 = vpop.f32.mrb[0].mxu0
        %v982 = vadd.f32 %v862, %v981
        %v983 = vpop.f32.mrb[0].mxu0
        %984 = vmatprep.mubr.bf16.mxu0 0
        %985 = vmatmul.mubr.bf16.gmra.mrb[0].mxu0 %v838
        %v986 = vpop.f32.mrb[0].mxu0
        %v987 = vadd.f32 %v862, %v986
        %v988 = vpop.f32.mrb[0].mxu0
        %v989 = vpop.f32.mrb[0].mxu0
        %v990 = vadd.f32 %v862, %v989
        %v991 = vpop.f32.mrb[0].mxu0
        %992 = vmatprep.mubr.bf16.mxu0 0
        %993 = vmatmul.mubr.bf16.gmra.mrb[0].mxu0 %v839
        %v994 = vpop.f32.mrb[0].mxu0
        %v995 = vadd.f32 %v862, %v994
        %v996 = vpop.f32.mrb[0].mxu0
        %v997 = vpop.f32.mrb[0].mxu0
        %v998 = vadd.f32 %v862, %v997
        %v999 = vpop.f32.mrb[0].mxu0
        %1000 = vmatprep.mubr.bf16.mxu0 0
        %1001 = vmatmul.mubr.bf16.gmra.mrb[0].mxu0 %v840
        %v1002 = vpop.f32.mrb[0].mxu0
        %v1003 = vadd.f32 %v862, %v1002
        %v1004 = vpop.f32.mrb[0].mxu0
        %v1005 = vpop.f32.mrb[0].mxu0
        %v1006 = vadd.f32 %v862, %v1005
        %v1007 = vpop.f32.mrb[0].mxu0
        %1008 = vdwg.mxu0
        %v1009 = vmul.f32 %v947, 0.5
        %v1010 = vmul.f32 %v950, 0.5
        %v1011 = vmul.f32 %v955, 0.5
        %v1012 = vmul.f32 %v958, 0.5
        %v1013 = vmul.f32 %v963, 0.5
        %v1014 = vmul.f32 %v966, 0.5
        %v1015 = vmul.f32 %v971, 0.5
        %v1016 = vmul.f32 %v974, 0.5
        %v1017 = vmul.f32 %v979, 0.5
        %v1018 = vmul.f32 %v982, 0.5
        %v1019 = vmul.f32 %v987, 0.5
        %v1020 = vmul.f32 %v990, 0.5
        %v1021 = vmul.f32 %v995, 0.5
        %v1022 = vmul.f32 %v998, 0.5
        %v1023 = vmul.f32 %v1003, 0.5
        %v1024 = vmul.f32 %v1006, 0.5
        %v1025 = vmul.f32 %v947, 0.044715
        %v1026 = vmul.f32 %v950, 0.044715
        %v1027 = vmul.f32 %v955, 0.044715
        %v1028 = vmul.f32 %v958, 0.044715
        %v1029 = vmul.f32 %v963, 0.044715
        %v1030 = vmul.f32 %v966, 0.044715
        %v1031 = vmul.f32 %v971, 0.044715
        %v1032 = vmul.f32 %v974, 0.044715
        %v1033 = vmul.f32 %v979, 0.044715
        %v1034 = vmul.f32 %v982, 0.044715
        %v1035 = vmul.f32 %v987, 0.044715
        %v1036 = vmul.f32 %v990, 0.044715
        %v1037 = vmul.f32 %v995, 0.044715
        %v1038 = vmul.f32 %v998, 0.044715
        %v1039 = vmul.f32 %v1003, 0.044715
        %v1040 = vmul.f32 %v1006, 0.044715
        %v1041 = vmul.f32 %v1025, %v947
        %v1042 = vmul.f32 %v1026, %v950
        %v1043 = vmul.f32 %v1027, %v955
        %v1044 = vmul.f32 %v1028, %v958
        %v1045 = vmul.f32 %v1029, %v963
        %v1046 = vmul.f32 %v1030, %v966
        %v1047 = vmul.f32 %v1031, %v971
        %v1048 = vmul.f32 %v1032, %v974
        %v1049 = vmul.f32 %v1033, %v979
        %v1050 = vmul.f32 %v1034, %v982
        %v1051 = vmul.f32 %v1035, %v987
        %v1052 = vmul.f32 %v1036, %v990
        %v1053 = vmul.f32 %v1037, %v995
        %v1054 = vmul.f32 %v1038, %v998
        %v1055 = vmul.f32 %v1039, %v1003
        %v1056 = vmul.f32 %v1040, %v1006
        %v1057 = vmul.f32 %v1041, %v947
        %v1058 = vmul.f32 %v1042, %v950
        %v1059 = vmul.f32 %v1043, %v955
        %v1060 = vmul.f32 %v1044, %v958
        %v1061 = vmul.f32 %v1045, %v963
        %v1062 = vmul.f32 %v1046, %v966
        %v1063 = vmul.f32 %v1047, %v971
        %v1064 = vmul.f32 %v1048, %v974
        %v1065 = vmul.f32 %v1049, %v979
        %v1066 = vmul.f32 %v1050, %v982
        %v1067 = vmul.f32 %v1051, %v987
        %v1068 = vmul.f32 %v1052, %v990
        %v1069 = vmul.f32 %v1053, %v995
        %v1070 = vmul.f32 %v1054, %v998
        %v1071 = vmul.f32 %v1055, %v1003
        %v1072 = vmul.f32 %v1056, %v1006
        %v1073 = vadd.f32 %v947, %v1057
        %v1074 = vadd.f32 %v950, %v1058
        %v1075 = vadd.f32 %v955, %v1059
        %v1076 = vadd.f32 %v958, %v1060
        %v1077 = vadd.f32 %v963, %v1061
        %v1078 = vadd.f32 %v966, %v1062
        %v1079 = vadd.f32 %v971, %v1063
        %v1080 = vadd.f32 %v974, %v1064
        %v1081 = vadd.f32 %v979, %v1065
        %v1082 = vadd.f32 %v982, %v1066
        %v1083 = vadd.f32 %v987, %v1067
        %v1084 = vadd.f32 %v990, %v1068
        %v1085 = vadd.f32 %v995, %v1069
        %v1086 = vadd.f32 %v998, %v1070
        %v1087 = vadd.f32 %v1003, %v1071
        %v1088 = vadd.f32 %v1006, %v1072
        %v1089 = vmul.f32 %v1073, 0.7978846
        %v1090 = vmul.f32 %v1074, 0.7978846
        %v1091 = vmul.f32 %v1075, 0.7978846
        %v1092 = vmul.f32 %v1076, 0.7978846
        %v1093 = vmul.f32 %v1077, 0.7978846
        %v1094 = vmul.f32 %v1078, 0.7978846
        %v1095 = vmul.f32 %v1079, 0.7978846
        %v1096 = vmul.f32 %v1080, 0.7978846
        %v1097 = vmul.f32 %v1081, 0.7978846
        %v1098 = vmul.f32 %v1082, 0.7978846
        %v1099 = vmul.f32 %v1083, 0.7978846
        %v1100 = vmul.f32 %v1084, 0.7978846
        %v1101 = vmul.f32 %v1085, 0.7978846
        %v1102 = vmul.f32 %v1086, 0.7978846
        %v1103 = vmul.f32 %v1087, 0.7978846
        %v1104 = vmul.f32 %v1088, 0.7978846
        %v1105 = vtanh.pop %v1089
        %v1106 = vtanh.pop %v1090
        %v1107 = vtanh.pop %v1091
        %v1108 = vtanh.pop %v1092
        %v1109 = vtanh.pop %v1093
        %v1110 = vtanh.pop %v1094
        %v1111 = vtanh.pop %v1095
        %v1112 = vtanh.pop %v1096
        %v1113 = vtanh.pop %v1097
        %v1114 = vtanh.pop %v1098
        %v1115 = vtanh.pop %v1099
        %v1116 = vtanh.pop %v1100
        %v1117 = vtanh.pop %v1101
        %v1118 = vtanh.pop %v1102
        %v1119 = vtanh.pop %v1103
        %v1120 = vtanh.pop %v1104
        %v1121 = vadd.f32 %v1105, 1.0
        %v1122 = vadd.f32 %v1106, 1.0
        %v1123 = vadd.f32 %v1107, 1.0
        %v1124 = vadd.f32 %v1108, 1.0
        %v1125 = vadd.f32 %v1109, 1.0
        %v1126 = vadd.f32 %v1110, 1.0
        %v1127 = vadd.f32 %v1111, 1.0
        %v1128 = vadd.f32 %v1112, 1.0
        %v1129 = vadd.f32 %v1113, 1.0
        %v1130 = vadd.f32 %v1114, 1.0
        %v1131 = vadd.f32 %v1115, 1.0
        %v1132 = vadd.f32 %v1116, 1.0
        %v1133 = vadd.f32 %v1117, 1.0
        %v1134 = vadd.f32 %v1118, 1.0
        %v1135 = vadd.f32 %v1119, 1.0
        %v1136 = vadd.f32 %v1120, 1.0
        %v1137 = vmul.f32 %v1009, %v1121
        %v1138 = vmul.f32 %v1010, %v1122
        %v1139 = vmul.f32 %v1011, %v1123
        %v1140 = vmul.f32 %v1012, %v1124
        %v1141 = vmul.f32 %v1013, %v1125
        %v1142 = vmul.f32 %v1014, %v1126
        %v1143 = vmul.f32 %v1015, %v1127
        %v1144 = vmul.f32 %v1016, %v1128
        %v1145 = vmul.f32 %v1017, %v1129
        %v1146 = vmul.f32 %v1018, %v1130
        %v1147 = vmul.f32 %v1019, %v1131
        %v1148 = vmul.f32 %v1020, %v1132
        %v1149 = vmul.f32 %v1021, %v1133
        %v1150 = vmul.f32 %v1022, %v1134
        %v1151 = vmul.f32 %v1023, %v1135
        %v1152 = vmul.f32 %v1024, %v1136
        %v1153 = vadd.f32 %v817, %v1137
        %v1154 = vadd.f32 %v818, %v1138
        %v1155 = vadd.f32 %v819, %v1139
        %v1156 = vadd.f32 %v820, %v1140
        %v1157 = vadd.f32 %v821, %v1141
        %v1158 = vadd.f32 %v822, %v1142
        %v1159 = vadd.f32 %v823, %v1143
        %v1160 = vadd.f32 %v824, %v1144
        %v1161 = vadd.f32 %v825, %v1145
        %v1162 = vadd.f32 %v826, %v1146
        %v1163 = vadd.f32 %v827, %v1147
        %v1164 = vadd.f32 %v828, %v1148
        %v1165 = vadd.f32 %v829, %v1149
        %v1166 = vadd.f32 %v830, %v1150
        %v1167 = vadd.f32 %v831, %v1151
        %v1168 = vadd.f32 %v832, %v1152
        %v1169 = vpack.c.bf16 %v1154, %v1153
        %v1170 = vpack.c.bf16 %v1156, %v1155
        %v1171 = vpack.c.bf16 %v1158, %v1157
        %v1172 = vpack.c.bf16 %v1160, %v1159
        %v1173 = vpack.c.bf16 %v1162, %v1161
        %v1174 = vpack.c.bf16 %v1164, %v1163
        %v1175 = vpack.c.bf16 %v1166, %v1165
        %v1176 = vpack.c.bf16 %v1168, %v1167
        %v1177 = vld [vmem:[#allocation8] sm:$0xf]
        %v1178 = vld [vmem:[#allocation8 + $0x4] sm:$0xf]
        %v1179 = vld [vmem:[#allocation8 + $0x8] sm:$0xf]
        %v1180 = vld [vmem:[#allocation8 + $0xc] sm:$0xf]
        %v1181 = vld [vmem:[#allocation8 + $0x10] sm:$0xf]
        %v1182 = vld [vmem:[#allocation8 + $0x14] sm:$0xf]
        %v1183 = vld [vmem:[#allocation8 + $0x18] sm:$0xf]
        %v1184 = vld [vmem:[#allocation8 + $0x1c] sm:$0xf]
        %v1185 = vld [vmem:[#allocation8 + $0x20] sm:$0xf]
        %v1186 = vld [vmem:[#allocation8 + $0x24] sm:$0xf]
        %v1187 = vld [vmem:[#allocation8 + $0x28] sm:$0xf]
        %v1188 = vld [vmem:[#allocation8 + $0x2c] sm:$0xf]
        %v1189 = vld [vmem:[#allocation8 + $0x30] sm:$0xf]
        %v1190 = vld [vmem:[#allocation8 + $0x34] sm:$0xf]
        %v1191 = vld [vmem:[#allocation8 + $0x38] sm:$0xf]
        %v1192 = vld [vmem:[#allocation8 + $0x3c] sm:$0xf]
        %v1193 = vld [vmem:[%s6] sm:$0x1]
        %v1195 = vlaneseq
        %v1196 = vshrl.u32 %v1195, 7
        %v1197 = vsub.s32 0, %v1196
        %v1198 = vrot.slane %v1193, %v1197
        %v1216 = vunpack.c.l.b16 %v1177
        %v1217 = vunpack.c.l.b16 %v1178
        %v1218 = vunpack.c.l.b16 %v1179
        %v1219 = vunpack.c.l.b16 %v1180
        %v1220 = vunpack.c.l.b16 %v1181
        %v1221 = vunpack.c.l.b16 %v1182
        %v1222 = vunpack.c.l.b16 %v1183
        %v1223 = vunpack.c.l.b16 %v1184
        %v1224 = vunpack.c.l.b16 %v1185
        %v1225 = vunpack.c.l.b16 %v1186
        %v1226 = vunpack.c.l.b16 %v1187
        %v1227 = vunpack.c.l.b16 %v1188
        %v1228 = vunpack.c.l.b16 %v1189
        %v1229 = vunpack.c.l.b16 %v1190
        %v1230 = vunpack.c.l.b16 %v1191
        %v1231 = vunpack.c.l.b16 %v1192
        %v1232 = vpack.c.b16 %v1217, %v1216
        %v1233 = vpack.c.b16 %v1219, %v1218
        %v1234 = vpack.c.b16 %v1221, %v1220
        %v1235 = vpack.c.b16 %v1223, %v1222
        %v1236 = vpack.c.b16 %v1225, %v1224
        %v1237 = vpack.c.b16 %v1227, %v1226
        %v1238 = vpack.c.b16 %v1229, %v1228
        %v1239 = vpack.c.b16 %v1231, %v1230
        %1248 = vmatprep.subr.bf16.mxu0 0
        %1249 = vmatpush1.bf16.msra.mxu0 %v1232
        %1250 = vmatprep.subr.bf16.mxu0 0
        %1251 = vmatpush1.bf16.msra.mxu0 %v1233
        %1252 = vmatprep.subr.bf16.mxu0 0
        %1253 = vmatpush1.bf16.msra.mxu0 %v1234
        %1254 = vmatprep.subr.bf16.mxu0 0
        %1255 = vmatpush1.bf16.msra.mxu0 %v1235
        %1256 = vmatprep.subr.bf16.mxu0 0
        %1257 = vmatpush1.bf16.msra.mxu0 %v1236
        %1258 = vmatprep.subr.bf16.mxu0 0
        %1259 = vmatpush1.bf16.msra.mxu0 %v1237
        %1260 = vmatprep.subr.bf16.mxu0 0
        %1261 = vmatpush1.bf16.msra.mxu0 %v1238
        %1262 = vmatprep.subr.bf16.mxu0 0
        %1263 = vmatpush1.bf16.msra.mxu0 %v1239
        %1264 = vmatprep.subr.bf16.mxu0 0
        %1265 = vmatpush1.bf16.msra.mxu0 0
        %1266 = vmatprep.subr.bf16.mxu0 0
        %1267 = vmatpush1.bf16.msra.mxu0 0
        %1268 = vmatprep.subr.bf16.mxu0 0
        %1269 = vmatpush1.bf16.msra.mxu0 0
        %1270 = vmatprep.subr.bf16.mxu0 0
        %1271 = vmatpush1.bf16.msra.mxu0 0
        %1272 = vmatprep.subr.bf16.mxu0 0
        %1273 = vmatpush1.bf16.msra.mxu0 0
        %1274 = vmatprep.subr.bf16.mxu0 0
        %1275 = vmatpush1.bf16.msra.mxu0 0
        %1276 = vmatprep.subr.bf16.mxu0 0
        %1277 = vmatpush1.bf16.msra.mxu0 0
        %1278 = vmatprep.subr.bf16.mxu0 0
        %1279 = vmatpush1.bf16.msra.mxu0 0
        %1280 = vmatprep.mubr.bf16.mxu0 0
        %1281 = vmatmul.mubr.bf16.gmra.mrb[0].mxu0 %v1169
        %v1282 = vpop.f32.mrb[0].mxu0
        %v1283 = vadd.f32 %v1198, %v1282
        %v1284 = vpop.f32.mrb[0].mxu0
        %v1285 = vpop.f32.mrb[0].mxu0
        %v1286 = vadd.f32 %v1198, %v1285
        %v1287 = vpop.f32.mrb[0].mxu0
        %1288 = vmatprep.mubr.bf16.mxu0 0
        %1289 = vmatmul.mubr.bf16.gmra.mrb[0].mxu0 %v1170
        %v1290 = vpop.f32.mrb[0].mxu0
        %v1291 = vadd.f32 %v1198, %v1290
        %v1292 = vpop.f32.mrb[0].mxu0
        %v1293 = vpop.f32.mrb[0].mxu0
        %v1294 = vadd.f32 %v1198, %v1293
        %v1295 = vpop.f32.mrb[0].mxu0
        %1296 = vmatprep.mubr.bf16.mxu0 0
        %1297 = vmatmul.mubr.bf16.gmra.mrb[0].mxu0 %v1171
        %v1298 = vpop.f32.mrb[0].mxu0
        %v1299 = vadd.f32 %v1198, %v1298
        %v1300 = vpop.f32.mrb[0].mxu0
        %v1301 = vpop.f32.mrb[0].mxu0
        %v1302 = vadd.f32 %v1198, %v1301
        %v1303 = vpop.f32.mrb[0].mxu0
        %1304 = vmatprep.mubr.bf16.mxu0 0
        %1305 = vmatmul.mubr.bf16.gmra.mrb[0].mxu0 %v1172
        %v1306 = vpop.f32.mrb[0].mxu0
        %v1307 = vadd.f32 %v1198, %v1306
        %v1308 = vpop.f32.mrb[0].mxu0
        %v1309 = vpop.f32.mrb[0].mxu0
        %v1310 = vadd.f32 %v1198, %v1309
        %v1311 = vpop.f32.mrb[0].mxu0
        %1312 = vmatprep.mubr.bf16.mxu0 0
        %1313 = vmatmul.mubr.bf16.gmra.mrb[0].mxu0 %v1173
        %v1314 = vpop.f32.mrb[0].mxu0
        %v1315 = vadd.f32 %v1198, %v1314
        %v1316 = vpop.f32.mrb[0].mxu0
        %v1317 = vpop.f32.mrb[0].mxu0
        %v1318 = vadd.f32 %v1198, %v1317
        %v1319 = vpop.f32.mrb[0].mxu0
        %1320 = vmatprep.mubr.bf16.mxu0 0
        %1321 = vmatmul.mubr.bf16.gmra.mrb[0].mxu0 %v1174
        %v1322 = vpop.f32.mrb[0].mxu0
        %v1323 = vadd.f32 %v1198, %v1322
        %v1324 = vpop.f32.mrb[0].mxu0
        %v1325 = vpop.f32.mrb[0].mxu0
        %v1326 = vadd.f32 %v1198, %v1325
        %v1327 = vpop.f32.mrb[0].mxu0
        %1328 = vmatprep.mubr.bf16.mxu0 0
        %1329 = vmatmul.mubr.bf16.gmra.mrb[0].mxu0 %v1175
        %v1330 = vpop.f32.mrb[0].mxu0
        %v1331 = vadd.f32 %v1198, %v1330
        %v1332 = vpop.f32.mrb[0].mxu0
        %v1333 = vpop.f32.mrb[0].mxu0
        %v1334 = vadd.f32 %v1198, %v1333
        %v1335 = vpop.f32.mrb[0].mxu0
        %1336 = vmatprep.mubr.bf16.mxu0 0
        %1337 = vmatmul.mubr.bf16.gmra.mrb[0].mxu0 %v1176
        %v1338 = vpop.f32.mrb[0].mxu0
        %v1339 = vadd.f32 %v1198, %v1338
        %v1340 = vpop.f32.mrb[0].mxu0
        %v1341 = vpop.f32.mrb[0].mxu0
        %v1342 = vadd.f32 %v1198, %v1341
        %v1343 = vpop.f32.mrb[0].mxu0
        %1344 = vdwg.mxu0
        %v1345 = vmul.f32 %v1283, 0.5
        %v1346 = vmul.f32 %v1286, 0.5
        %v1347 = vmul.f32 %v1291, 0.5
        %v1348 = vmul.f32 %v1294, 0.5
        %v1349 = vmul.f32 %v1299, 0.5
        %v1350 = vmul.f32 %v1302, 0.5
        %v1351 = vmul.f32 %v1307, 0.5
        %v1352 = vmul.f32 %v1310, 0.5
        %v1353 = vmul.f32 %v1315, 0.5
        %v1354 = vmul.f32 %v1318, 0.5
        %v1355 = vmul.f32 %v1323, 0.5
        %v1356 = vmul.f32 %v1326, 0.5
        %v1357 = vmul.f32 %v1331, 0.5
        %v1358 = vmul.f32 %v1334, 0.5
        %v1359 = vmul.f32 %v1339, 0.5
        %v1360 = vmul.f32 %v1342, 0.5
        %v1361 = vmul.f32 %v1283, 0.044715
        %v1362 = vmul.f32 %v1286, 0.044715
        %v1363 = vmul.f32 %v1291, 0.044715
        %v1364 = vmul.f32 %v1294, 0.044715
        %v1365 = vmul.f32 %v1299, 0.044715
        %v1366 = vmul.f32 %v1302, 0.044715
        %v1367 = vmul.f32 %v1307, 0.044715
        %v1368 = vmul.f32 %v1310, 0.044715
        %v1369 = vmul.f32 %v1315, 0.044715
        %v1370 = vmul.f32 %v1318, 0.044715
        %v1371 = vmul.f32 %v1323, 0.044715
        %v1372 = vmul.f32 %v1326, 0.044715
        %v1373 = vmul.f32 %v1331, 0.044715
        %v1374 = vmul.f32 %v1334, 0.044715
        %v1375 = vmul.f32 %v1339, 0.044715
        %v1376 = vmul.f32 %v1342, 0.044715
        %v1377 = vmul.f32 %v1361, %v1283
        %v1378 = vmul.f32 %v1362, %v1286
        %v1379 = vmul.f32 %v1363, %v1291
        %v1380 = vmul.f32 %v1364, %v1294
        %v1381 = vmul.f32 %v1365, %v1299
        %v1382 = vmul.f32 %v1366, %v1302
        %v1383 = vmul.f32 %v1367, %v1307
        %v1384 = vmul.f32 %v1368, %v1310
        %v1385 = vmul.f32 %v1369, %v1315
        %v1386 = vmul.f32 %v1370, %v1318
        %v1387 = vmul.f32 %v1371, %v1323
        %v1388 = vmul.f32 %v1372, %v1326
        %v1389 = vmul.f32 %v1373, %v1331
        %v1390 = vmul.f32 %v1374, %v1334
        %v1391 = vmul.f32 %v1375, %v1339
        %v1392 = vmul.f32 %v1376, %v1342
        %v1393 = vmul.f32 %v1377, %v1283
        %v1394 = vmul.f32 %v1378, %v1286
        %v1395 = vmul.f32 %v1379, %v1291
        %v1396 = vmul.f32 %v1380, %v1294
        %v1397 = vmul.f32 %v1381, %v1299
        %v1398 = vmul.f32 %v1382, %v1302
        %v1399 = vmul.f32 %v1383, %v1307
        %v1400 = vmul.f32 %v1384, %v1310
        %v1401 = vmul.f32 %v1385, %v1315
        %v1402 = vmul.f32 %v1386, %v1318
        %v1403 = vmul.f32 %v1387, %v1323
        %v1404 = vmul.f32 %v1388, %v1326
        %v1405 = vmul.f32 %v1389, %v1331
        %v1406 = vmul.f32 %v1390, %v1334
        %v1407 = vmul.f32 %v1391, %v1339
        %v1408 = vmul.f32 %v1392, %v1342
        %v1409 = vadd.f32 %v1283, %v1393
        %v1410 = vadd.f32 %v1286, %v1394
        %v1411 = vadd.f32 %v1291, %v1395
        %v1412 = vadd.f32 %v1294, %v1396
        %v1413 = vadd.f32 %v1299, %v1397
        %v1414 = vadd.f32 %v1302, %v1398
        %v1415 = vadd.f32 %v1307, %v1399
        %v1416 = vadd.f32 %v1310, %v1400
        %v1417 = vadd.f32 %v1315, %v1401
        %v1418 = vadd.f32 %v1318, %v1402
        %v1419 = vadd.f32 %v1323, %v1403
        %v1420 = vadd.f32 %v1326, %v1404
        %v1421 = vadd.f32 %v1331, %v1405
        %v1422 = vadd.f32 %v1334, %v1406
        %v1423 = vadd.f32 %v1339, %v1407
        %v1424 = vadd.f32 %v1342, %v1408
        %v1425 = vmul.f32 %v1409, 0.7978846
        %v1426 = vmul.f32 %v1410, 0.7978846
        %v1427 = vmul.f32 %v1411, 0.7978846
        %v1428 = vmul.f32 %v1412, 0.7978846
        %v1429 = vmul.f32 %v1413, 0.7978846
        %v1430 = vmul.f32 %v1414, 0.7978846
        %v1431 = vmul.f32 %v1415, 0.7978846
        %v1432 = vmul.f32 %v1416, 0.7978846
        %v1433 = vmul.f32 %v1417, 0.7978846
        %v1434 = vmul.f32 %v1418, 0.7978846
        %v1435 = vmul.f32 %v1419, 0.7978846
        %v1436 = vmul.f32 %v1420, 0.7978846
        %v1437 = vmul.f32 %v1421, 0.7978846
        %v1438 = vmul.f32 %v1422, 0.7978846
        %v1439 = vmul.f32 %v1423, 0.7978846
        %v1440 = vmul.f32 %v1424, 0.7978846
        %v1441 = vtanh.pop %v1425
        %v1442 = vtanh.pop %v1426
        %v1443 = vtanh.pop %v1427
        %v1444 = vtanh.pop %v1428
        %v1445 = vtanh.pop %v1429
        %v1446 = vtanh.pop %v1430
        %v1447 = vtanh.pop %v1431
        %v1448 = vtanh.pop %v1432
        %v1449 = vtanh.pop %v1433
        %v1450 = vtanh.pop %v1434
        %v1451 = vtanh.pop %v1435
        %v1452 = vtanh.pop %v1436
        %v1453 = vtanh.pop %v1437
        %v1454 = vtanh.pop %v1438
        %v1455 = vtanh.pop %v1439
        %v1456 = vtanh.pop %v1440
        %v1457 = vadd.f32 %v1441, 1.0
        %v1458 = vadd.f32 %v1442, 1.0
        %v1459 = vadd.f32 %v1443, 1.0
        %v1460 = vadd.f32 %v1444, 1.0
        %v1461 = vadd.f32 %v1445, 1.0
        %v1462 = vadd.f32 %v1446, 1.0
        %v1463 = vadd.f32 %v1447, 1.0
        %v1464 = vadd.f32 %v1448, 1.0
        %v1465 = vadd.f32 %v1449, 1.0
        %v1466 = vadd.f32 %v1450, 1.0
        %v1467 = vadd.f32 %v1451, 1.0
        %v1468 = vadd.f32 %v1452, 1.0
        %v1469 = vadd.f32 %v1453, 1.0
        %v1470 = vadd.f32 %v1454, 1.0
        %v1471 = vadd.f32 %v1455, 1.0
        %v1472 = vadd.f32 %v1456, 1.0
        %v1473 = vmul.f32 %v1345, %v1457
        %v1474 = vmul.f32 %v1346, %v1458
        %v1475 = vmul.f32 %v1347, %v1459
        %v1476 = vmul.f32 %v1348, %v1460
        %v1477 = vmul.f32 %v1349, %v1461
        %v1478 = vmul.f32 %v1350, %v1462
        %v1479 = vmul.f32 %v1351, %v1463
        %v1480 = vmul.f32 %v1352, %v1464
        %v1481 = vmul.f32 %v1353, %v1465
        %v1482 = vmul.f32 %v1354, %v1466
        %v1483 = vmul.f32 %v1355, %v1467
        %v1484 = vmul.f32 %v1356, %v1468
        %v1485 = vmul.f32 %v1357, %v1469
        %v1486 = vmul.f32 %v1358, %v1470
        %v1487 = vmul.f32 %v1359, %v1471
        %v1488 = vmul.f32 %v1360, %v1472
        %v1489 = vadd.f32 %v1153, %v1473
        %v1490 = vadd.f32 %v1154, %v1474
        %v1491 = vadd.f32 %v1155, %v1475
        %v1492 = vadd.f32 %v1156, %v1476
        %v1493 = vadd.f32 %v1157, %v1477
        %v1494 = vadd.f32 %v1158, %v1478
        %v1495 = vadd.f32 %v1159, %v1479
        %v1496 = vadd.f32 %v1160, %v1480
        %v1497 = vadd.f32 %v1161, %v1481
        %v1498 = vadd.f32 %v1162, %v1482
        %v1499 = vadd.f32 %v1163, %v1483
        %v1500 = vadd.f32 %v1164, %v1484
        %v1501 = vadd.f32 %v1165, %v1485
        %v1502 = vadd.f32 %v1166, %v1486
        %v1503 = vadd.f32 %v1167, %v1487
        %v1504 = vadd.f32 %v1168, %v1488
        %v1505 = vpack.c.bf16 %v1490, %v1489
        %v1506 = vpack.c.bf16 %v1492, %v1491
        %v1507 = vpack.c.bf16 %v1494, %v1493
        %v1508 = vpack.c.bf16 %v1496, %v1495
        %v1509 = vpack.c.bf16 %v1498, %v1497
        %v1510 = vpack.c.bf16 %v1500, %v1499
        %v1511 = vpack.c.bf16 %v1502, %v1501
        %v1512 = vpack.c.bf16 %v1504, %v1503
        %v1513 = vld [vmem:[#allocation10] sm:$0xf]
        %v1514 = vld [vmem:[#allocation10 + $0x4] sm:$0xf]
        %v1515 = vld [vmem:[#allocation10 + $0x8] sm:$0xf]
        %v1516 = vld [vmem:[#allocation10 + $0xc] sm:$0xf]
        %v1517 = vld [vmem:[#allocation10 + $0x10] sm:$0xf]
        %v1518 = vld [vmem:[#allocation10 + $0x14] sm:$0xf]
        %v1519 = vld [vmem:[#allocation10 + $0x18] sm:$0xf]
        %v1520 = vld [vmem:[#allocation10 + $0x1c] sm:$0xf]
        %v1521 = vld [vmem:[#allocation10 + $0x20] sm:$0xf]
        %v1522 = vld [vmem:[#allocation10 + $0x24] sm:$0xf]
        %v1523 = vld [vmem:[#allocation10 + $0x28] sm:$0xf]
        %v1524 = vld [vmem:[#allocation10 + $0x2c] sm:$0xf]
        %v1525 = vld [vmem:[#allocation10 + $0x30] sm:$0xf]
        %v1526 = vld [vmem:[#allocation10 + $0x34] sm:$0xf]
        %v1527 = vld [vmem:[#allocation10 + $0x38] sm:$0xf]
        %v1528 = vld [vmem:[#allocation10 + $0x3c] sm:$0xf]
        %v1529 = vld [vmem:[%s8] sm:$0x1]
        %v1531 = vlaneseq
        %v1532 = vshrl.u32 %v1531, 7
        %v1533 = vsub.s32 0, %v1532
        %v1534 = vrot.slane %v1529, %v1533
        %v1552 = vunpack.c.l.b16 %v1513
        %v1553 = vunpack.c.l.b16 %v1514
        %v1554 = vunpack.c.l.b16 %v1515
        %v1555 = vunpack.c.l.b16 %v1516
        %v1556 = vunpack.c.l.b16 %v1517
        %v1557 = vunpack.c.l.b16 %v1518
        %v1558 = vunpack.c.l.b16 %v1519
        %v1559 = vunpack.c.l.b16 %v1520
        %v1560 = vunpack.c.l.b16 %v1521
        %v1561 = vunpack.c.l.b16 %v1522
        %v1562 = vunpack.c.l.b16 %v1523
        %v1563 = vunpack.c.l.b16 %v1524
        %v1564 = vunpack.c.l.b16 %v1525
        %v1565 = vunpack.c.l.b16 %v1526
        %v1566 = vunpack.c.l.b16 %v1527
        %v1567 = vunpack.c.l.b16 %v1528
        %v1568 = vpack.c.b16 %v1553, %v1552
        %v1569 = vpack.c.b16 %v1555, %v1554
        %v1570 = vpack.c.b16 %v1557, %v1556
        %v1571 = vpack.c.b16 %v1559, %v1558
        %v1572 = vpack.c.b16 %v1561, %v1560
        %v1573 = vpack.c.b16 %v1563, %v1562
        %v1574 = vpack.c.b16 %v1565, %v1564
        %v1575 = vpack.c.b16 %v1567, %v1566
        %1584 = vmatprep.subr.bf16.mxu0 0
        %1585 = vmatpush1.bf16.msra.mxu0 %v1568
        %1586 = vmatprep.subr.bf16.mxu0 0
        %1587 = vmatpush1.bf16.msra.mxu0 %v1569
        %1588 = vmatprep.subr.bf16.mxu0 0
        %1589 = vmatpush1.bf16.msra.mxu0 %v1570
        %1590 = vmatprep.subr.bf16.mxu0 0
        %1591 = vmatpush1.bf16.msra.mxu0 %v1571
        %1592 = vmatprep.subr.bf16.mxu0 0
        %1593 = vmatpush1.bf16.msra.mxu0 %v1572
        %1594 = vmatprep.subr.bf16.mxu0 0
        %1595 = vmatpush1.bf16.msra.mxu0 %v1573
        %1596 = vmatprep.subr.bf16.mxu0 0
        %1597 = vmatpush1.bf16.msra.mxu0 %v1574
        %1598 = vmatprep.subr.bf16.mxu0 0
        %1599 = vmatpush1.bf16.msra.mxu0 %v1575
        %1600 = vmatprep.subr.bf16.mxu0 0
        %1601 = vmatpush1.bf16.msra.mxu0 0
        %1602 = vmatprep.subr.bf16.mxu0 0
        %1603 = vmatpush1.bf16.msra.mxu0 0
        %1604 = vmatprep.subr.bf16.mxu0 0
        %1605 = vmatpush1.bf16.msra.mxu0 0
        %1606 = vmatprep.subr.bf16.mxu0 0
        %1607 = vmatpush1.bf16.msra.mxu0 0
        %1608 = vmatprep.subr.bf16.mxu0 0
        %1609 = vmatpush1.bf16.msra.mxu0 0
        %1610 = vmatprep.subr.bf16.mxu0 0
        %1611 = vmatpush1.bf16.msra.mxu0 0
        %1612 = vmatprep.subr.bf16.mxu0 0
        %1613 = vmatpush1.bf16.msra.mxu0 0
        %1614 = vmatprep.subr.bf16.mxu0 0
        %1615 = vmatpush1.bf16.msra.mxu0 0
        %1616 = vmatprep.mubr.bf16.mxu0 0
        %1617 = vmatmul.mubr.bf16.gmra.mrb[0].mxu0 %v1505
        %v1618 = vpop.f32.mrb[0].mxu0
        %v1619 = vadd.f32 %v1534, %v1618
        %v1620 = vpop.f32.mrb[0].mxu0
        %v1621 = vpop.f32.mrb[0].mxu0
        %v1622 = vadd.f32 %v1534, %v1621
        %v1623 = vpop.f32.mrb[0].mxu0
        %1624 = vmatprep.mubr.bf16.mxu0 0
        %1625 = vmatmul.mubr.bf16.gmra.mrb[0].mxu0 %v1506
        %v1626 = vpop.f32.mrb[0].mxu0
        %v1627 = vadd.f32 %v1534, %v1626
        %v1628 = vpop.f32.mrb[0].mxu0
        %v1629 = vpop.f32.mrb[0].mxu0
        %v1630 = vadd.f32 %v1534, %v1629
        %v1631 = vpop.f32.mrb[0].mxu0
        %1632 = vmatprep.mubr.bf16.mxu0 0
        %1633 = vmatmul.mubr.bf16.gmra.mrb[0].mxu0 %v1507
        %v1634 = vpop.f32.mrb[0].mxu0
        %v1635 = vadd.f32 %v1534, %v1634
        %v1636 = vpop.f32.mrb[0].mxu0
        %v1637 = vpop.f32.mrb[0].mxu0
        %v1638 = vadd.f32 %v1534, %v1637
        %v1639 = vpop.f32.mrb[0].mxu0
        %1640 = vmatprep.mubr.bf16.mxu0 0
        %1641 = vmatmul.mubr.bf16.gmra.mrb[0].mxu0 %v1508
        %v1642 = vpop.f32.mrb[0].mxu0
        %v1643 = vadd.f32 %v1534, %v1642
        %v1644 = vpop.f32.mrb[0].mxu0
        %v1645 = vpop.f32.mrb[0].mxu0
        %v1646 = vadd.f32 %v1534, %v1645
        %v1647 = vpop.f32.mrb[0].mxu0
        %1648 = vmatprep.mubr.bf16.mxu0 0
        %1649 = vmatmul.mubr.bf16.gmra.mrb[0].mxu0 %v1509
        %v1650 = vpop.f32.mrb[0].mxu0
        %v1651 = vadd.f32 %v1534, %v1650
        %v1652 = vpop.f32.mrb[0].mxu0
        %v1653 = vpop.f32.mrb[0].mxu0
        %v1654 = vadd.f32 %v1534, %v1653
        %v1655 = vpop.f32.mrb[0].mxu0
        %1656 = vmatprep.mubr.bf16.mxu0 0
        %1657 = vmatmul.mubr.bf16.gmra.mrb[0].mxu0 %v1510
        %v1658 = vpop.f32.mrb[0].mxu0
        %v1659 = vadd.f32 %v1534, %v1658
        %v1660 = vpop.f32.mrb[0].mxu0
        %v1661 = vpop.f32.mrb[0].mxu0
        %v1662 = vadd.f32 %v1534, %v1661
        %v1663 = vpop.f32.mrb[0].mxu0
        %1664 = vmatprep.mubr.bf16.mxu0 0
        %1665 = vmatmul.mubr.bf16.gmra.mrb[0].mxu0 %v1511
        %v1666 = vpop.f32.mrb[0].mxu0
        %v1667 = vadd.f32 %v1534, %v1666
        %v1668 = vpop.f32.mrb[0].mxu0
        %v1669 = vpop.f32.mrb[0].mxu0
        %v1670 = vadd.f32 %v1534, %v1669
        %v1671 = vpop.f32.mrb[0].mxu0
        %1672 = vmatprep.mubr.bf16.mxu0 0
        %1673 = vmatmul.mubr.bf16.gmra.mrb[0].mxu0 %v1512
        %v1674 = vpop.f32.mrb[0].mxu0
        %v1675 = vadd.f32 %v1534, %v1674
        %v1676 = vpop.f32.mrb[0].mxu0
        %v1677 = vpop.f32.mrb[0].mxu0
        %v1678 = vadd.f32 %v1534, %v1677
        %v1679 = vpop.f32.mrb[0].mxu0
        %1680 = vdwg.mxu0
        %v1681 = vmul.f32 %v1619, 0.5
        %v1682 = vmul.f32 %v1622, 0.5
        %v1683 = vmul.f32 %v1627, 0.5
        %v1684 = vmul.f32 %v1630, 0.5
        %v1685 = vmul.f32 %v1635, 0.5
        %v1686 = vmul.f32 %v1638, 0.5
        %v1687 = vmul.f32 %v1643, 0.5
        %v1688 = vmul.f32 %v1646, 0.5
        %v1689 = vmul.f32 %v1651, 0.5
        %v1690 = vmul.f32 %v1654, 0.5
        %v1691 = vmul.f32 %v1659, 0.5
        %v1692 = vmul.f32 %v1662, 0.5
        %v1693 = vmul.f32 %v1667, 0.5
        %v1694 = vmul.f32 %v1670, 0.5
        %v1695 = vmul.f32 %v1675, 0.5
        %v1696 = vmul.f32 %v1678, 0.5
        %v1697 = vmul.f32 %v1619, 0.044715
        %v1698 = vmul.f32 %v1622, 0.044715
        %v1699 = vmul.f32 %v1627, 0.044715
        %v1700 = vmul.f32 %v1630, 0.044715
        %v1701 = vmul.f32 %v1635, 0.044715
        %v1702 = vmul.f32 %v1638, 0.044715
        %v1703 = vmul.f32 %v1643, 0.044715
        %v1704 = vmul.f32 %v1646, 0.044715
        %v1705 = vmul.f32 %v1651, 0.044715
        %v1706 = vmul.f32 %v1654, 0.044715
        %v1707 = vmul.f32 %v1659, 0.044715
        %v1708 = vmul.f32 %v1662, 0.044715
        %v1709 = vmul.f32 %v1667, 0.044715
        %v1710 = vmul.f32 %v1670, 0.044715
        %v1711 = vmul.f32 %v1675, 0.044715
        %v1712 = vmul.f32 %v1678, 0.044715
        %v1713 = vmul.f32 %v1697, %v1619
        %v1714 = vmul.f32 %v1698, %v1622
        %v1715 = vmul.f32 %v1699, %v1627
        %v1716 = vmul.f32 %v1700, %v1630
        %v1717 = vmul.f32 %v1701, %v1635
        %v1718 = vmul.f32 %v1702, %v1638
        %v1719 = vmul.f32 %v1703, %v1643
        %v1720 = vmul.f32 %v1704, %v1646
        %v1721 = vmul.f32 %v1705, %v1651
        %v1722 = vmul.f32 %v1706, %v1654
        %v1723 = vmul.f32 %v1707, %v1659
        %v1724 = vmul.f32 %v1708, %v1662
        %v1725 = vmul.f32 %v1709, %v1667
        %v1726 = vmul.f32 %v1710, %v1670
        %v1727 = vmul.f32 %v1711, %v1675
        %v1728 = vmul.f32 %v1712, %v1678
        %v1729 = vmul.f32 %v1713, %v1619
        %v1730 = vmul.f32 %v1714, %v1622
        %v1731 = vmul.f32 %v1715, %v1627
        %v1732 = vmul.f32 %v1716, %v1630
        %v1733 = vmul.f32 %v1717, %v1635
        %v1734 = vmul.f32 %v1718, %v1638
        %v1735 = vmul.f32 %v1719, %v1643
        %v1736 = vmul.f32 %v1720, %v1646
        %v1737 = vmul.f32 %v1721, %v1651
        %v1738 = vmul.f32 %v1722, %v1654
        %v1739 = vmul.f32 %v1723, %v1659
        %v1740 = vmul.f32 %v1724, %v1662
        %v1741 = vmul.f32 %v1725, %v1667
        %v1742 = vmul.f32 %v1726, %v1670
        %v1743 = vmul.f32 %v1727, %v1675
        %v1744 = vmul.f32 %v1728, %v1678
        %v1745 = vadd.f32 %v1619, %v1729
        %v1746 = vadd.f32 %v1622, %v1730
        %v1747 = vadd.f32 %v1627, %v1731
        %v1748 = vadd.f32 %v1630, %v1732
        %v1749 = vadd.f32 %v1635, %v1733
        %v1750 = vadd.f32 %v1638, %v1734
        %v1751 = vadd.f32 %v1643, %v1735
        %v1752 = vadd.f32 %v1646, %v1736
        %v1753 = vadd.f32 %v1651, %v1737
        %v1754 = vadd.f32 %v1654, %v1738
        %v1755 = vadd.f32 %v1659, %v1739
        %v1756 = vadd.f32 %v1662, %v1740
        %v1757 = vadd.f32 %v1667, %v1741
        %v1758 = vadd.f32 %v1670, %v1742
        %v1759 = vadd.f32 %v1675, %v1743
        %v1760 = vadd.f32 %v1678, %v1744
        %v1761 = vmul.f32 %v1745, 0.7978846
        %v1762 = vmul.f32 %v1746, 0.7978846
        %v1763 = vmul.f32 %v1747, 0.7978846
        %v1764 = vmul.f32 %v1748, 0.7978846
        %v1765 = vmul.f32 %v1749, 0.7978846
        %v1766 = vmul.f32 %v1750, 0.7978846
        %v1767 = vmul.f32 %v1751, 0.7978846
        %v1768 = vmul.f32 %v1752, 0.7978846
        %v1769 = vmul.f32 %v1753, 0.7978846
        %v1770 = vmul.f32 %v1754, 0.7978846
        %v1771 = vmul.f32 %v1755, 0.7978846
        %v1772 = vmul.f32 %v1756, 0.7978846
        %v1773 = vmul.f32 %v1757, 0.7978846
        %v1774 = vmul.f32 %v1758, 0.7978846
        %v1775 = vmul.f32 %v1759, 0.7978846
        %v1776 = vmul.f32 %v1760, 0.7978846
        %v1777 = vtanh.pop %v1761
        %v1778 = vtanh.pop %v1762
        %v1779 = vtanh.pop %v1763
        %v1780 = vtanh.pop %v1764
        %v1781 = vtanh.pop %v1765
        %v1782 = vtanh.pop %v1766
        %v1783 = vtanh.pop %v1767
        %v1784 = vtanh.pop %v1768
        %v1785 = vtanh.pop %v1769
        %v1786 = vtanh.pop %v1770
        %v1787 = vtanh.pop %v1771
        %v1788 = vtanh.pop %v1772
        %v1789 = vtanh.pop %v1773
        %v1790 = vtanh.pop %v1774
        %v1791 = vtanh.pop %v1775
        %v1792 = vtanh.pop %v1776
        %v1793 = vadd.f32 %v1777, 1.0
        %v1794 = vadd.f32 %v1778, 1.0
        %v1795 = vadd.f32 %v1779, 1.0
        %v1796 = vadd.f32 %v1780, 1.0
        %v1797 = vadd.f32 %v1781, 1.0
        %v1798 = vadd.f32 %v1782, 1.0
        %v1799 = vadd.f32 %v1783, 1.0
        %v1800 = vadd.f32 %v1784, 1.0
        %v1801 = vadd.f32 %v1785, 1.0
        %v1802 = vadd.f32 %v1786, 1.0
        %v1803 = vadd.f32 %v1787, 1.0
        %v1804 = vadd.f32 %v1788, 1.0
        %v1805 = vadd.f32 %v1789, 1.0
        %v1806 = vadd.f32 %v1790, 1.0
        %v1807 = vadd.f32 %v1791, 1.0
        %v1808 = vadd.f32 %v1792, 1.0
        %v1809 = vmul.f32 %v1681, %v1793
        %v1810 = vmul.f32 %v1682, %v1794
        %v1811 = vmul.f32 %v1683, %v1795
        %v1812 = vmul.f32 %v1684, %v1796
        %v1813 = vmul.f32 %v1685, %v1797
        %v1814 = vmul.f32 %v1686, %v1798
        %v1815 = vmul.f32 %v1687, %v1799
        %v1816 = vmul.f32 %v1688, %v1800
        %v1817 = vmul.f32 %v1689, %v1801
        %v1818 = vmul.f32 %v1690, %v1802
        %v1819 = vmul.f32 %v1691, %v1803
        %v1820 = vmul.f32 %v1692, %v1804
        %v1821 = vmul.f32 %v1693, %v1805
        %v1822 = vmul.f32 %v1694, %v1806
        %v1823 = vmul.f32 %v1695, %v1807
        %v1824 = vmul.f32 %v1696, %v1808
        %v1825 = vadd.f32 %v1489, %v1809
        %v1826 = vadd.f32 %v1490, %v1810
        %v1827 = vadd.f32 %v1491, %v1811
        %v1828 = vadd.f32 %v1492, %v1812
        %v1829 = vadd.f32 %v1493, %v1813
        %v1830 = vadd.f32 %v1494, %v1814
        %v1831 = vadd.f32 %v1495, %v1815
        %v1832 = vadd.f32 %v1496, %v1816
        %v1833 = vadd.f32 %v1497, %v1817
        %v1834 = vadd.f32 %v1498, %v1818
        %v1835 = vadd.f32 %v1499, %v1819
        %v1836 = vadd.f32 %v1500, %v1820
        %v1837 = vadd.f32 %v1501, %v1821
        %v1838 = vadd.f32 %v1502, %v1822
        %v1839 = vadd.f32 %v1503, %v1823
        %v1840 = vadd.f32 %v1504, %v1824
        %v1841 = vpack.c.bf16 %v1826, %v1825
        %v1842 = vpack.c.bf16 %v1828, %v1827
        %v1843 = vpack.c.bf16 %v1830, %v1829
        %v1844 = vpack.c.bf16 %v1832, %v1831
        %v1845 = vpack.c.bf16 %v1834, %v1833
        %v1846 = vpack.c.bf16 %v1836, %v1835
        %v1847 = vpack.c.bf16 %v1838, %v1837
        %v1848 = vpack.c.bf16 %v1840, %v1839
        %v1849 = vld [vmem:[#allocation11] sm:$0xff]
        %v1850 = vld [vmem:[#allocation11 + $0x8] sm:$0xff]
        %v1851 = vld [vmem:[#allocation11 + $0x10] sm:$0xff]
        %v1852 = vld [vmem:[#allocation11 + $0x18] sm:$0xff]
        %v1853 = vld [vmem:[#allocation11 + $0x20] sm:$0xff]
        %v1854 = vld [vmem:[#allocation11 + $0x28] sm:$0xff]
        %v1855 = vld [vmem:[#allocation11 + $0x30] sm:$0xff]
        %v1856 = vld [vmem:[#allocation11 + $0x38] sm:$0xff]
        %v1857 = vld [vmem:[#allocation11 + $0x40] sm:$0xff]
        %v1858 = vld [vmem:[#allocation11 + $0x48] sm:$0xff]
        %v1859 = vld [vmem:[#allocation11 + $0x50] sm:$0xff]
        %v1860 = vld [vmem:[#allocation11 + $0x58] sm:$0xff]
        %v1861 = vld [vmem:[#allocation11 + $0x60] sm:$0xff]
        %v1862 = vld [vmem:[#allocation11 + $0x68] sm:$0xff]
        %v1863 = vld [vmem:[#allocation11 + $0x70] sm:$0xff]
        %v1864 = vld [vmem:[#allocation11 + $0x78] sm:$0xff]
        %v1865 = vld [vmem:[%s10] sm:$0x3]
        %v1867 = vlaneseq
        %v1868 = vshrl.u32 %v1867, 7
        %v1869 = vsub.s32 0, %v1868
        %v1870 = vrot.slane %v1865, %v1869
        %v1871 = vlaneseq
        %v1872 = vshrl.u32 %v1871, 7
        %v1873 = vsub.s32 1, %v1872
        %v1874 = vrot.slane %v1865, %v1873
        %v1893 = vunpack.c.l.b16 %v1849
        %v1894 = vunpack.c.h.b16 %v1849
        %v1895 = vunpack.c.l.b16 %v1850
        %v1896 = vunpack.c.h.b16 %v1850
        %v1897 = vunpack.c.l.b16 %v1851
        %v1898 = vunpack.c.h.b16 %v1851
        %v1899 = vunpack.c.l.b16 %v1852
        %v1900 = vunpack.c.h.b16 %v1852
        %v1901 = vunpack.c.l.b16 %v1853
        %v1902 = vunpack.c.h.b16 %v1853
        %v1903 = vunpack.c.l.b16 %v1854
        %v1904 = vunpack.c.h.b16 %v1854
        %v1905 = vunpack.c.l.b16 %v1855
        %v1906 = vunpack.c.h.b16 %v1855
        %v1907 = vunpack.c.l.b16 %v1856
        %v1908 = vunpack.c.h.b16 %v1856
        %v1909 = vunpack.c.l.b16 %v1857
        %v1910 = vunpack.c.h.b16 %v1857
        %v1911 = vunpack.c.l.b16 %v1858
        %v1912 = vunpack.c.h.b16 %v1858
        %v1913 = vunpack.c.l.b16 %v1859
        %v1914 = vunpack.c.h.b16 %v1859
        %v1915 = vunpack.c.l.b16 %v1860
        %v1916 = vunpack.c.h.b16 %v1860
        %v1917 = vunpack.c.l.b16 %v1861
        %v1918 = vunpack.c.h.b16 %v1861
        %v1919 = vunpack.c.l.b16 %v1862
        %v1920 = vunpack.c.h.b16 %v1862
        %v1921 = vunpack.c.l.b16 %v1863
        %v1922 = vunpack.c.h.b16 %v1863
        %v1923 = vunpack.c.l.b16 %v1864
        %v1924 = vunpack.c.h.b16 %v1864
        %v1925 = vpack.c.b16 %v1895, %v1893
        %v1926 = vpack.c.b16 %v1896, %v1894
        %v1927 = vpack.c.b16 %v1899, %v1897
        %v1928 = vpack.c.b16 %v1900, %v1898
        %v1929 = vpack.c.b16 %v1903, %v1901
        %v1930 = vpack.c.b16 %v1904, %v1902
        %v1931 = vpack.c.b16 %v1907, %v1905
        %v1932 = vpack.c.b16 %v1908, %v1906
        %v1933 = vpack.c.b16 %v1911, %v1909
        %v1934 = vpack.c.b16 %v1912, %v1910
        %v1935 = vpack.c.b16 %v1915, %v1913
        %v1936 = vpack.c.b16 %v1916, %v1914
        %v1937 = vpack.c.b16 %v1919, %v1917
        %v1938 = vpack.c.b16 %v1920, %v1918
        %v1939 = vpack.c.b16 %v1923, %v1921
        %v1940 = vpack.c.b16 %v1924, %v1922
        %1957 = vmatprep.subr.bf16.mxu0 %v1926
        %1958 = vmatpush1.bf16.msra.mxu0 %v1925
        %1959 = vmatprep.subr.bf16.mxu0 %v1928
        %1960 = vmatpush1.bf16.msra.mxu0 %v1927
        %1961 = vmatprep.subr.bf16.mxu0 %v1930
        %1962 = vmatpush1.bf16.msra.mxu0 %v1929
        %1963 = vmatprep.subr.bf16.mxu0 %v1932
        %1964 = vmatpush1.bf16.msra.mxu0 %v1931
        %1965 = vmatprep.subr.bf16.mxu0 %v1934
        %1966 = vmatpush1.bf16.msra.mxu0 %v1933
        %1967 = vmatprep.subr.bf16.mxu0 %v1936
        %1968 = vmatpush1.bf16.msra.mxu0 %v1935
        %1969 = vmatprep.subr.bf16.mxu0 %v1938
        %1970 = vmatpush1.bf16.msra.mxu0 %v1937
        %1971 = vmatprep.subr.bf16.mxu0 %v1940
        %1972 = vmatpush1.bf16.msra.mxu0 %v1939
        %1973 = vmatprep.subr.bf16.mxu0 0
        %1974 = vmatpush1.bf16.msra.mxu0 0
        %1975 = vmatprep.subr.bf16.mxu0 0
        %1976 = vmatpush1.bf16.msra.mxu0 0
        %1977 = vmatprep.subr.bf16.mxu0 0
        %1978 = vmatpush1.bf16.msra.mxu0 0
        %1979 = vmatprep.subr.bf16.mxu0 0
        %1980 = vmatpush1.bf16.msra.mxu0 0
        %1981 = vmatprep.subr.bf16.mxu0 0
        %1982 = vmatpush1.bf16.msra.mxu0 0
        %1983 = vmatprep.subr.bf16.mxu0 0
        %1984 = vmatpush1.bf16.msra.mxu0 0
        %1985 = vmatprep.subr.bf16.mxu0 0
        %1986 = vmatpush1.bf16.msra.mxu0 0
        %1987 = vmatprep.subr.bf16.mxu0 0
        %1988 = vmatpush1.bf16.msra.mxu0 0
        %1989 = vmatprep.mubr.bf16.mxu0 0
        %1990 = vmatmul.mubr.bf16.gmra.mrb[0].mxu0 %v1841
        %v1991 = vpop.f32.mrb[0].mxu0
        %v1992 = vadd.f32 %v1870, %v1991
        %v1993 = vpop.f32.mrb[0].mxu0
        %v1994 = vadd.f32 %v1874, %v1993
        %v1995 = vpop.f32.mrb[0].mxu0
        %v1996 = vadd.f32 %v1870, %v1995
        %v1997 = vpop.f32.mrb[0].mxu0
        %v1998 = vadd.f32 %v1874, %v1997
        %1999 = vmatprep.mubr.bf16.mxu0 0
        %2000 = vmatmul.mubr.bf16.gmra.mrb[0].mxu0 %v1842
        %v2001 = vpop.f32.mrb[0].mxu0
        %v2002 = vadd.f32 %v1870, %v2001
        %v2003 = vpop.f32.mrb[0].mxu0
        %v2004 = vadd.f32 %v1874, %v2003
        %v2005 = vpop.f32.mrb[0].mxu0
        %v2006 = vadd.f32 %v1870, %v2005
        %v2007 = vpop.f32.mrb[0].mxu0
        %v2008 = vadd.f32 %v1874, %v2007
        %2009 = vmatprep.mubr.bf16.mxu0 0
        %2010 = vmatmul.mubr.bf16.gmra.mrb[0].mxu0 %v1843
        %v2011 = vpop.f32.mrb[0].mxu0
        %v2012 = vadd.f32 %v1870, %v2011
        %v2013 = vpop.f32.mrb[0].mxu0
        %v2014 = vadd.f32 %v1874, %v2013
        %v2015 = vpop.f32.mrb[0].mxu0
        %v2016 = vadd.f32 %v1870, %v2015
        %v2017 = vpop.f32.mrb[0].mxu0
        %v2018 = vadd.f32 %v1874, %v2017
        %2019 = vmatprep.mubr.bf16.mxu0 0
        %2020 = vmatmul.mubr.bf16.gmra.mrb[0].mxu0 %v1844
        %v2021 = vpop.f32.mrb[0].mxu0
        %v2022 = vadd.f32 %v1870, %v2021
        %v2023 = vpop.f32.mrb[0].mxu0
        %v2024 = vadd.f32 %v1874, %v2023
        %v2025 = vpop.f32.mrb[0].mxu0
        %v2026 = vadd.f32 %v1870, %v2025
        %v2027 = vpop.f32.mrb[0].mxu0
        %v2028 = vadd.f32 %v1874, %v2027
        %2029 = vmatprep.mubr.bf16.mxu0 0
        %2030 = vmatmul.mubr.bf16.gmra.mrb[0].mxu0 %v1845
        %v2031 = vpop.f32.mrb[0].mxu0
        %v2032 = vadd.f32 %v1870, %v2031
        %v2033 = vpop.f32.mrb[0].mxu0
        %v2034 = vadd.f32 %v1874, %v2033
        %v2035 = vpop.f32.mrb[0].mxu0
        %v2036 = vadd.f32 %v1870, %v2035
        %v2037 = vpop.f32.mrb[0].mxu0
        %v2038 = vadd.f32 %v1874, %v2037
        %2039 = vmatprep.mubr.bf16.mxu0 0
        %2040 = vmatmul.mubr.bf16.gmra.mrb[0].mxu0 %v1846
        %v2041 = vpop.f32.mrb[0].mxu0
        %v2042 = vadd.f32 %v1870, %v2041
        %v2043 = vpop.f32.mrb[0].mxu0
        %v2044 = vadd.f32 %v1874, %v2043
        %v2045 = vpop.f32.mrb[0].mxu0
        %v2046 = vadd.f32 %v1870, %v2045
        %v2047 = vpop.f32.mrb[0].mxu0
        %v2048 = vadd.f32 %v1874, %v2047
        %2049 = vmatprep.mubr.bf16.mxu0 0
        %2050 = vmatmul.mubr.bf16.gmra.mrb[0].mxu0 %v1847
        %v2051 = vpop.f32.mrb[0].mxu0
        %v2052 = vadd.f32 %v1870, %v2051
        %v2053 = vpop.f32.mrb[0].mxu0
        %v2054 = vadd.f32 %v1874, %v2053
        %v2055 = vpop.f32.mrb[0].mxu0
        %v2056 = vadd.f32 %v1870, %v2055
        %v2057 = vpop.f32.mrb[0].mxu0
        %v2058 = vadd.f32 %v1874, %v2057
        %2059 = vmatprep.mubr.bf16.mxu0 0
        %2060 = vmatmul.mubr.bf16.gmra.mrb[0].mxu0 %v1848
        %v2061 = vpop.f32.mrb[0].mxu0
        %v2062 = vadd.f32 %v1870, %v2061
        %v2063 = vpop.f32.mrb[0].mxu0
        %v2064 = vadd.f32 %v1874, %v2063
        %v2065 = vpop.f32.mrb[0].mxu0
        %v2066 = vadd.f32 %v1870, %v2065
        %v2067 = vpop.f32.mrb[0].mxu0
        %v2068 = vadd.f32 %v1874, %v2067
        %2069 = vdwg.mxu0
        %v2070 = vmul.f32 %v1992, 0.5
        %v2071 = vmul.f32 %v1994, 0.5
        %v2072 = vmul.f32 %v1996, 0.5
        %v2073 = vmul.f32 %v1998, 0.5
        %v2074 = vmul.f32 %v2002, 0.5
        %v2075 = vmul.f32 %v2004, 0.5
        %v2076 = vmul.f32 %v2006, 0.5
        %v2077 = vmul.f32 %v2008, 0.5
        %v2078 = vmul.f32 %v2012, 0.5
        %v2079 = vmul.f32 %v2014, 0.5
        %v2080 = vmul.f32 %v2016, 0.5
        %v2081 = vmul.f32 %v2018, 0.5
        %v2082 = vmul.f32 %v2022, 0.5
        %v2083 = vmul.f32 %v2024, 0.5
        %v2084 = vmul.f32 %v2026, 0.5
        %v2085 = vmul.f32 %v2028, 0.5
        %v2086 = vmul.f32 %v2032, 0.5
        %v2087 = vmul.f32 %v2034, 0.5
        %v2088 = vmul.f32 %v2036, 0.5
        %v2089 = vmul.f32 %v2038, 0.5
        %v2090 = vmul.f32 %v2042, 0.5
        %v2091 = vmul.f32 %v2044, 0.5
        %v2092 = vmul.f32 %v2046, 0.5
        %v2093 = vmul.f32 %v2048, 0.5
        %v2094 = vmul.f32 %v2052, 0.5
        %v2095 = vmul.f32 %v2054, 0.5
        %v2096 = vmul.f32 %v2056, 0.5
        %v2097 = vmul.f32 %v2058, 0.5
        %v2098 = vmul.f32 %v2062, 0.5
        %v2099 = vmul.f32 %v2064, 0.5
        %v2100 = vmul.f32 %v2066, 0.5
        %v2101 = vmul.f32 %v2068, 0.5
        %v2102 = vmul.f32 %v1992, 0.044715
        %v2103 = vmul.f32 %v1994, 0.044715
        %v2104 = vmul.f32 %v1996, 0.044715
        %v2105 = vmul.f32 %v1998, 0.044715
        %v2106 = vmul.f32 %v2002, 0.044715
        %v2107 = vmul.f32 %v2004, 0.044715
        %v2108 = vmul.f32 %v2006, 0.044715
        %v2109 = vmul.f32 %v2008, 0.044715
        %v2110 = vmul.f32 %v2012, 0.044715
        %v2111 = vmul.f32 %v2014, 0.044715
        %v2112 = vmul.f32 %v2016, 0.044715
        %v2113 = vmul.f32 %v2018, 0.044715
        %v2114 = vmul.f32 %v2022, 0.044715
        %v2115 = vmul.f32 %v2024, 0.044715
        %v2116 = vmul.f32 %v2026, 0.044715
        %v2117 = vmul.f32 %v2028, 0.044715
        %v2118 = vmul.f32 %v2032, 0.044715
        %v2119 = vmul.f32 %v2034, 0.044715
        %v2120 = vmul.f32 %v2036, 0.044715
        %v2121 = vmul.f32 %v2038, 0.044715
        %v2122 = vmul.f32 %v2042, 0.044715
        %v2123 = vmul.f32 %v2044, 0.044715
        %v2124 = vmul.f32 %v2046, 0.044715
        %v2125 = vmul.f32 %v2048, 0.044715
        %v2126 = vmul.f32 %v2052, 0.044715
        %v2127 = vmul.f32 %v2054, 0.044715
        %v2128 = vmul.f32 %v2056, 0.044715
        %v2129 = vmul.f32 %v2058, 0.044715
        %v2130 = vmul.f32 %v2062, 0.044715
        %v2131 = vmul.f32 %v2064, 0.044715
        %v2132 = vmul.f32 %v2066, 0.044715
        %v2133 = vmul.f32 %v2068, 0.044715
        %v2134 = vmul.f32 %v2102, %v1992
        %v2135 = vmul.f32 %v2103, %v1994
        %v2136 = vmul.f32 %v2104, %v1996
        %v2137 = vmul.f32 %v2105, %v1998
        %v2138 = vmul.f32 %v2106, %v2002
        %v2139 = vmul.f32 %v2107, %v2004
        %v2140 = vmul.f32 %v2108, %v2006
        %v2141 = vmul.f32 %v2109, %v2008
        %v2142 = vmul.f32 %v2110, %v2012
        %v2143 = vmul.f32 %v2111, %v2014
        %v2144 = vmul.f32 %v2112, %v2016
        %v2145 = vmul.f32 %v2113, %v2018
        %v2146 = vmul.f32 %v2114, %v2022
        %v2147 = vmul.f32 %v2115, %v2024
        %v2148 = vmul.f32 %v2116, %v2026
        %v2149 = vmul.f32 %v2117, %v2028
        %v2150 = vmul.f32 %v2118, %v2032
        %v2151 = vmul.f32 %v2119, %v2034
        %v2152 = vmul.f32 %v2120, %v2036
        %v2153 = vmul.f32 %v2121, %v2038
        %v2154 = vmul.f32 %v2122, %v2042
        %v2155 = vmul.f32 %v2123, %v2044
        %v2156 = vmul.f32 %v2124, %v2046
        %v2157 = vmul.f32 %v2125, %v2048
        %v2158 = vmul.f32 %v2126, %v2052
        %v2159 = vmul.f32 %v2127, %v2054
        %v2160 = vmul.f32 %v2128, %v2056
        %v2161 = vmul.f32 %v2129, %v2058
        %v2162 = vmul.f32 %v2130, %v2062
        %v2163 = vmul.f32 %v2131, %v2064
        %v2164 = vmul.f32 %v2132, %v2066
        %v2165 = vmul.f32 %v2133, %v2068
        %v2166 = vmul.f32 %v2134, %v1992
        %v2167 = vmul.f32 %v2135, %v1994
        %v2168 = vmul.f32 %v2136, %v1996
        %v2169 = vmul.f32 %v2137, %v1998
        %v2170 = vmul.f32 %v2138, %v2002
        %v2171 = vmul.f32 %v2139, %v2004
        %v2172 = vmul.f32 %v2140, %v2006
        %v2173 = vmul.f32 %v2141, %v2008
        %v2174 = vmul.f32 %v2142, %v2012
        %v2175 = vmul.f32 %v2143, %v2014
        %v2176 = vmul.f32 %v2144, %v2016
        %v2177 = vmul.f32 %v2145, %v2018
        %v2178 = vmul.f32 %v2146, %v2022
        %v2179 = vmul.f32 %v2147, %v2024
        %v2180 = vmul.f32 %v2148, %v2026
        %v2181 = vmul.f32 %v2149, %v2028
        %v2182 = vmul.f32 %v2150, %v2032
        %v2183 = vmul.f32 %v2151, %v2034
        %v2184 = vmul.f32 %v2152, %v2036
        %v2185 = vmul.f32 %v2153, %v2038
        %v2186 = vmul.f32 %v2154, %v2042
        %v2187 = vmul.f32 %v2155, %v2044
        %v2188 = vmul.f32 %v2156, %v2046
        %v2189 = vmul.f32 %v2157, %v2048
        %v2190 = vmul.f32 %v2158, %v2052
        %v2191 = vmul.f32 %v2159, %v2054
        %v2192 = vmul.f32 %v2160, %v2056
        %v2193 = vmul.f32 %v2161, %v2058
        %v2194 = vmul.f32 %v2162, %v2062
        %v2195 = vmul.f32 %v2163, %v2064
        %v2196 = vmul.f32 %v2164, %v2066
        %v2197 = vmul.f32 %v2165, %v2068
        %v2198 = vadd.f32 %v1992, %v2166
        %v2199 = vadd.f32 %v1994, %v2167
        %v2200 = vadd.f32 %v1996, %v2168
        %v2201 = vadd.f32 %v1998, %v2169
        %v2202 = vadd.f32 %v2002, %v2170
        %v2203 = vadd.f32 %v2004, %v2171
        %v2204 = vadd.f32 %v2006, %v2172
        %v2205 = vadd.f32 %v2008, %v2173
        %v2206 = vadd.f32 %v2012, %v2174
        %v2207 = vadd.f32 %v2014, %v2175
        %v2208 = vadd.f32 %v2016, %v2176
        %v2209 = vadd.f32 %v2018, %v2177
        %v2210 = vadd.f32 %v2022, %v2178
        %v2211 = vadd.f32 %v2024, %v2179
        %v2212 = vadd.f32 %v2026, %v2180
        %v2213 = vadd.f32 %v2028, %v2181
        %v2214 = vadd.f32 %v2032, %v2182
        %v2215 = vadd.f32 %v2034, %v2183
        %v2216 = vadd.f32 %v2036, %v2184
        %v2217 = vadd.f32 %v2038, %v2185
        %v2218 = vadd.f32 %v2042, %v2186
        %v2219 = vadd.f32 %v2044, %v2187
        %v2220 = vadd.f32 %v2046, %v2188
        %v2221 = vadd.f32 %v2048, %v2189
        %v2222 = vadd.f32 %v2052, %v2190
        %v2223 = vadd.f32 %v2054, %v2191
        %v2224 = vadd.f32 %v2056, %v2192
        %v2225 = vadd.f32 %v2058, %v2193
        %v2226 = vadd.f32 %v2062, %v2194
        %v2227 = vadd.f32 %v2064, %v2195
        %v2228 = vadd.f32 %v2066, %v2196
        %v2229 = vadd.f32 %v2068, %v2197
        %v2230 = vmul.f32 %v2198, 0.7978846
        %v2231 = vmul.f32 %v2199, 0.7978846
        %v2232 = vmul.f32 %v2200, 0.7978846
        %v2233 = vmul.f32 %v2201, 0.7978846
        %v2234 = vmul.f32 %v2202, 0.7978846
        %v2235 = vmul.f32 %v2203, 0.7978846
        %v2236 = vmul.f32 %v2204, 0.7978846
        %v2237 = vmul.f32 %v2205, 0.7978846
        %v2238 = vmul.f32 %v2206, 0.7978846
        %v2239 = vmul.f32 %v2207, 0.7978846
        %v2240 = vmul.f32 %v2208, 0.7978846
        %v2241 = vmul.f32 %v2209, 0.7978846
        %v2242 = vmul.f32 %v2210, 0.7978846
        %v2243 = vmul.f32 %v2211, 0.7978846
        %v2244 = vmul.f32 %v2212, 0.7978846
        %v2245 = vmul.f32 %v2213, 0.7978846
        %v2246 = vmul.f32 %v2214, 0.7978846
        %v2247 = vmul.f32 %v2215, 0.7978846
        %v2248 = vmul.f32 %v2216, 0.7978846
        %v2249 = vmul.f32 %v2217, 0.7978846
        %v2250 = vmul.f32 %v2218, 0.7978846
        %v2251 = vmul.f32 %v2219, 0.7978846
        %v2252 = vmul.f32 %v2220, 0.7978846
        %v2253 = vmul.f32 %v2221, 0.7978846
        %v2254 = vmul.f32 %v2222, 0.7978846
        %v2255 = vmul.f32 %v2223, 0.7978846
        %v2256 = vmul.f32 %v2224, 0.7978846
        %v2257 = vmul.f32 %v2225, 0.7978846
        %v2258 = vmul.f32 %v2226, 0.7978846
        %v2259 = vmul.f32 %v2227, 0.7978846
        %v2260 = vmul.f32 %v2228, 0.7978846
        %v2261 = vmul.f32 %v2229, 0.7978846
        %v2262 = vtanh.pop %v2230
        %v2263 = vtanh.pop %v2231
        %v2264 = vtanh.pop %v2232
        %v2265 = vtanh.pop %v2233
        %v2266 = vtanh.pop %v2234
        %v2267 = vtanh.pop %v2235
        %v2268 = vtanh.pop %v2236
        %v2269 = vtanh.pop %v2237
        %v2270 = vtanh.pop %v2238
        %v2271 = vtanh.pop %v2239
        %v2272 = vtanh.pop %v2240
        %v2273 = vtanh.pop %v2241
        %v2274 = vtanh.pop %v2242
        %v2275 = vtanh.pop %v2243
        %v2276 = vtanh.pop %v2244
        %v2277 = vtanh.pop %v2245
        %v2278 = vtanh.pop %v2246
        %v2279 = vtanh.pop %v2247
        %v2280 = vtanh.pop %v2248
        %v2281 = vtanh.pop %v2249
        %v2282 = vtanh.pop %v2250
        %v2283 = vtanh.pop %v2251
        %v2284 = vtanh.pop %v2252
        %v2285 = vtanh.pop %v2253
        %v2286 = vtanh.pop %v2254
        %v2287 = vtanh.pop %v2255
        %v2288 = vtanh.pop %v2256
        %v2289 = vtanh.pop %v2257
        %v2290 = vtanh.pop %v2258
        %v2291 = vtanh.pop %v2259
        %v2292 = vtanh.pop %v2260
        %v2293 = vtanh.pop %v2261
        %v2294 = vadd.f32 %v2262, 1.0
        %v2295 = vadd.f32 %v2263, 1.0
        %v2296 = vadd.f32 %v2264, 1.0
        %v2297 = vadd.f32 %v2265, 1.0
        %v2298 = vadd.f32 %v2266, 1.0
        %v2299 = vadd.f32 %v2267, 1.0
        %v2300 = vadd.f32 %v2268, 1.0
        %v2301 = vadd.f32 %v2269, 1.0
        %v2302 = vadd.f32 %v2270, 1.0
        %v2303 = vadd.f32 %v2271, 1.0
        %v2304 = vadd.f32 %v2272, 1.0
        %v2305 = vadd.f32 %v2273, 1.0
        %v2306 = vadd.f32 %v2274, 1.0
        %v2307 = vadd.f32 %v2275, 1.0
        %v2308 = vadd.f32 %v2276, 1.0
        %v2309 = vadd.f32 %v2277, 1.0
        %v2310 = vadd.f32 %v2278, 1.0
        %v2311 = vadd.f32 %v2279, 1.0
        %v2312 = vadd.f32 %v2280, 1.0
        %v2313 = vadd.f32 %v2281, 1.0
        %v2314 = vadd.f32 %v2282, 1.0
        %v2315 = vadd.f32 %v2283, 1.0
        %v2316 = vadd.f32 %v2284, 1.0
        %v2317 = vadd.f32 %v2285, 1.0
        %v2318 = vadd.f32 %v2286, 1.0
        %v2319 = vadd.f32 %v2287, 1.0
        %v2320 = vadd.f32 %v2288, 1.0
        %v2321 = vadd.f32 %v2289, 1.0
        %v2322 = vadd.f32 %v2290, 1.0
        %v2323 = vadd.f32 %v2291, 1.0
        %v2324 = vadd.f32 %v2292, 1.0
        %v2325 = vadd.f32 %v2293, 1.0
        %v2326 = vmul.f32 %v2070, %v2294
        %v2327 = vmul.f32 %v2071, %v2295
        %v2328 = vmul.f32 %v2072, %v2296
        %v2329 = vmul.f32 %v2073, %v2297
        %v2330 = vmul.f32 %v2074, %v2298
        %v2331 = vmul.f32 %v2075, %v2299
        %v2332 = vmul.f32 %v2076, %v2300
        %v2333 = vmul.f32 %v2077, %v2301
        %v2334 = vmul.f32 %v2078, %v2302
        %v2335 = vmul.f32 %v2079, %v2303
        %v2336 = vmul.f32 %v2080, %v2304
        %v2337 = vmul.f32 %v2081, %v2305
        %v2338 = vmul.f32 %v2082, %v2306
        %v2339 = vmul.f32 %v2083, %v2307
        %v2340 = vmul.f32 %v2084, %v2308
        %v2341 = vmul.f32 %v2085, %v2309
        %v2342 = vmul.f32 %v2086, %v2310
        %v2343 = vmul.f32 %v2087, %v2311
        %v2344 = vmul.f32 %v2088, %v2312
        %v2345 = vmul.f32 %v2089, %v2313
        %v2346 = vmul.f32 %v2090, %v2314
        %v2347 = vmul.f32 %v2091, %v2315
        %v2348 = vmul.f32 %v2092, %v2316
        %v2349 = vmul.f32 %v2093, %v2317
        %v2350 = vmul.f32 %v2094, %v2318
        %v2351 = vmul.f32 %v2095, %v2319
        %v2352 = vmul.f32 %v2096, %v2320
        %v2353 = vmul.f32 %v2097, %v2321
        %v2354 = vmul.f32 %v2098, %v2322
        %v2355 = vmul.f32 %v2099, %v2323
        %v2356 = vmul.f32 %v2100, %v2324
        %v2357 = vmul.f32 %v2101, %v2325
        %2358 = vst [vmem:[%s477] sm:$0xff] %v2326
        %2359 = vst [vmem:[%s477 + $0x8] sm:$0xff] %v2327
        %2360 = vst [vmem:[%s477 + $0x10] sm:$0xff] %v2328
        %2361 = vst [vmem:[%s477 + $0x18] sm:$0xff] %v2329
        %2362 = vst [vmem:[%s477 + $0x20] sm:$0xff] %v2330
        %2363 = vst [vmem:[%s477 + $0x28] sm:$0xff] %v2331
        %2364 = vst [vmem:[%s477 + $0x30] sm:$0xff] %v2332
        %2365 = vst [vmem:[%s477 + $0x38] sm:$0xff] %v2333
        %2366 = vst [vmem:[%s477 + $0x40] sm:$0xff] %v2334
        %2367 = vst [vmem:[%s477 + $0x48] sm:$0xff] %v2335
        %2368 = vst [vmem:[%s477 + $0x50] sm:$0xff] %v2336
        %2369 = vst [vmem:[%s477 + $0x58] sm:$0xff] %v2337
        %2370 = vst [vmem:[%s477 + $0x60] sm:$0xff] %v2338
        %2371 = vst [vmem:[%s477 + $0x68] sm:$0xff] %v2339
        %2372 = vst [vmem:[%s477 + $0x70] sm:$0xff] %v2340
        %2373 = vst [vmem:[%s477 + $0x78] sm:$0xff] %v2341
        %2374 = vst [vmem:[%s477 + $0x80] sm:$0xff] %v2342
        %2375 = vst [vmem:[%s477 + $0x88] sm:$0xff] %v2343
        %2376 = vst [vmem:[%s477 + $0x90] sm:$0xff] %v2344
        %2377 = vst [vmem:[%s477 + $0x98] sm:$0xff] %v2345
        %2378 = vst [vmem:[%s477 + $0xa0] sm:$0xff] %v2346
        %2379 = vst [vmem:[%s477 + $0xa8] sm:$0xff] %v2347
        %2380 = vst [vmem:[%s477 + $0xb0] sm:$0xff] %v2348
        %2381 = vst [vmem:[%s477 + $0xb8] sm:$0xff] %v2349
        %2382 = vst [vmem:[%s477 + $0xc0] sm:$0xff] %v2350
        %2383 = vst [vmem:[%s477 + $0xc8] sm:$0xff] %v2351
        %2384 = vst [vmem:[%s477 + $0xd0] sm:$0xff] %v2352
        %2385 = vst [vmem:[%s477 + $0xd8] sm:$0xff] %v2353
        %2386 = vst [vmem:[%s477 + $0xe0] sm:$0xff] %v2354
        %2387 = vst [vmem:[%s477 + $0xe8] sm:$0xff] %v2355
        %2388 = vst [vmem:[%s477 + $0xf0] sm:$0xff] %v2356
        %2389 = vst [vmem:[%s477 + $0xf8] sm:$0xff] %v2357
        %s2390 = sand.u32 %s275, 1
        %s2391 = scalar_lea.sflag [#allocation4], %s2390
        %s2392 = sand.u32 %s275, 1
        %s2393 = smul.addr %s2392, 256
        %s2394 = scalar_lea.vmem [#allocation13], %s2393
        // Predicated region
        $region89: #{tpu_custom_call.1} parent=63 // pred_check
          %p2395 = pneg %p285
        $region90: #{tpu_custom_call.1} parent=63 // pred_check_branch
          %2397 = sbr.rel (%p2395) target = $region92
        $region91: #{tpu_custom_call.1} parent=63 // pred_region
          %s2398 = smul.u32 16, %s31
          %s2400 = ssub.s32 4096, 4096
          %2401 = vsyncadd %s2391, %s2400
          %s2402 = smul.addr %s2398, 2
          %s2403 = smul.addr %s2402, 128
          %s2404 = scalar_lea.hbm %s11, %s2403
          %s2405 = sshll.u32 %s2394, 4
          %s2406 = int_to_ptr.vmem [resolvable:$true] %s2405
          %2411 = dma.vmem_to_hbm [thread:$0]  %s2406, 4096, %s2404, %s2391, 256, 256, 16
        $region92: #{tpu_custom_call.1} parent=63 // pred_fallthru
          _
      $region64: #{tpu_custom_call.1} parent=5 // pred_fallthru
        _
      %p2412 = scmp.le.s32.totalorder 2, %s26
      // Predicated region
      $region93: #{tpu_custom_call.1} parent=5 // pred_check
        %p2413 = pneg %p2412
      $region94: #{tpu_custom_call.1} parent=5 // pred_check_branch
        %2415 = sbr.rel (%p2413) target = $region96
      $region95: #{tpu_custom_call.1} parent=5 // pred_region
        %s2416 = ssub.s32 %s26, 2
        // Predicated region
        $region97: #{tpu_custom_call.1} parent=95 // pred_check
          %p2417 = pneg %p291
        $region98: #{tpu_custom_call.1} parent=95 // pred_check_branch
          %2419 = sbr.rel (%p2417) target = $region100
        $region99: #{tpu_custom_call.1} parent=95 // pred_region
          %s2420 = sand.u32 %s276, 1
          %s2421 = scalar_lea.sflag [#allocation4], %s2420
          %s2422 = sand.u32 %s276, 1
          %s2423 = smul.addr %s2422, 256
          %s2424 = scalar_lea.vmem [#allocation13], %s2423
          %2425 = dma.done %s2421, 4096
        $region100: #{tpu_custom_call.1} parent=95 // pred_fallthru
          _
      $region96: #{tpu_custom_call.1} parent=5 // pred_fallthru
        _
    $region6: #{tpu_custom_call.1} parent=1 // loop_footer
      %s30 = sadd.s32 1, %s26
    $region7: #{tpu_custom_call.1} parent=1 // loop_footer_branch
      %25 = sbr.rel target = $region3
    $region8: #{tpu_custom_call.1} parent=1 // loop_exit
      _
    %2426 = vsyncpa [#allocation3], 1
    %s2427 = scalar_lea.sflag [#allocation3], 1
    %2428 = vsyncpa %s2427, 1
    %2429 = vsyncpa [#allocation6], 1
    %2430 = vsyncpa [#allocation9], 1
    %2431 = vsyncpa [#allocation12], 1
    %2432 = vsyncpa [#allocation4], 1
    %s2433 = scalar_lea.sflag [#allocation4], 1
    %2434 = vsyncpa %s2433, 1

</llo_original>
